<compile_context>
chip_gen: v5e
topology: v5e:2x2
jax: 0.10.0
libtpu: 0.0.40
codegen_flags: <defaults>
</compile_context>

<pallas_src>
from functools import partial

import numpy as np

import jax
import jax.numpy as jnp
from jax.experimental import pallas as pl
from jax.experimental.pallas import tpu as pltpu


# 3x3 tap offsets, tap index t = (dh + 1) * 3 + (dw + 1) (row-major over the
# kernel window) -- must match the host-side weight flattening below.
_TAPS = tuple((dh, dw) for dh in (-1, 0, 1) for dw in (-1, 0, 1))


def _border_masks(h, w):
    """(9, H*W) f32 masks: 1 where tap (dh, dw) stays inside the image."""
    p = np.arange(h * w)
    i, j = p // w, p % w
    masks = np.zeros((9, h * w), np.float32)
    for t, (dh, dw) in enumerate(_TAPS):
        ok = (i + dh >= 0) & (i + dh < h) & (j + dw >= 0) & (j + dw < w)
        masks[t] = ok.astype(np.float32)
    return masks


def _conv3x3_im2col(h, w_ref, masks, patch_ref, w_dim, mxu_dtype):
    """One 'SAME' 3x3 cross-correlation as a single im2col MXU matmul.

    h:         (Ci, Q) f32 activations, Q = NB*H*W, image-major flat layout.
    w_ref:     (Co, 9*Ci) weight Ref (rows tap-major: (dh*3+dw)*Ci + ci),
               BN scale already folded in, MXU dtype.
    masks:     list of 9 (1, Q) f32 border masks.
    patch_ref: (9*Cmax, Q) mxu_dtype VMEM scratch, reused by every layer.
    Returns (Co, Q) f32.
    """
    ci, q = h.shape
    for t, (dh, dw) in enumerate(_TAPS):
        s = dh * w_dim + dw                                    # flat tap shift
        if s == 0:
            tap = h                                            # center tap, mask == 1
        else:
            # Circular roll over the flat batch-block axis (XLU).  Every
            # position whose tap crosses a row or image boundary (including
            # the circular wrap) is zeroed by the border mask.
            tap = pltpu.roll(h, shift=(-s) % q, axis=1) * masks[t]
        # Cast fused into the store: the patch matrix only ever exists in the
        # MXU dtype, inside one reusable scratch buffer.
        patch_ref[pl.ds(t * ci, ci), :] = tap.astype(mxu_dtype)
    patches = patch_ref[pl.ds(0, 9 * ci), :]                   # (9*Ci, Q)
    # (Co, 9*Ci) x (9*Ci, Q) -> (Co, Q), f32 accumulate, lane dim = Q.
    return jnp.dot(w_ref[...], patches, preferred_element_type=jnp.float32)


def _make_kernel(nb, w_dim, mxu_dtype):

    def kernel(x_ref, m_ref,
               w1_ref, b1_ref, w2_ref, b2_ref, w3_ref, b3_ref,
               w4_ref, b4_ref, w5_ref,
               o_ref, patch_ref):
        # Per-image border masks, tiled across the batch block once (f32).
        m = m_ref[...]                                         # (9, HW)
        if nb > 1:
            m = jnp.concatenate([m] * nb, axis=1)              # (9, Q)
        masks = [m[t:t + 1, :] for t in range(9)]

        # Channel-wise mean / max (torch dim=1), built directly in the
        # channel-major flat layout: hcur is (2, NB*H*W).
        x = x_ref[...].astype(jnp.float32)                     # (NB, C, HW)
        avg_cols, max_cols = [], []
        for img in range(nb):
            xi = x[img]                                        # (C, HW)
            avg_cols.append(jnp.mean(xi, axis=0, keepdims=True))
            max_cols.append(jnp.max(xi, axis=0, keepdims=True))
        hcur = jnp.concatenate(
            [jnp.concatenate(avg_cols, axis=1),
             jnp.concatenate(max_cols, axis=1)], axis=0)       # (2, Q) f32

        def conv(hh, wref):
            return _conv3x3_im2col(hh, wref, masks, patch_ref, w_dim, mxu_dtype)

        def bias_relu(y, b_ref):                               # BN scale folded into W
            return jnp.maximum(y + b_ref[...], 0.0)

        hcur = bias_relu(conv(hcur, w1_ref), b1_ref)           # (2*num, Q)
        hcur = bias_relu(conv(hcur, w2_ref), b2_ref)           # (4*num, Q)
        hcur = bias_relu(conv(hcur, w3_ref), b3_ref)           # (4*num, Q)
        hcur = bias_relu(conv(hcur, w4_ref), b4_ref)           # (2*num, Q)
        hcur = conv(hcur, w5_ref)                              # (num, Q)

        # Softmax over channels (sublane axis); reciprocal on the EUP.
        z = hcur - jnp.max(hcur, axis=0, keepdims=True)
        e = jnp.exp(z)
        inv = pl.reciprocal(jnp.sum(e, axis=0, keepdims=True), approx=True)
        o_ref[...] = (e * inv).astype(o_ref.dtype)             # (num, Q)

    return kernel


def _vmem_capacity_bytes():
    try:
        return int(pltpu.get_tpu_info().vmem_capacity_bytes)
    except Exception:
        return 64 * 1024 * 1024          # conservative default (v7x per-core)


def _working_set_bytes(nb, c, hw, num):
    """Rough per-grid-step VMEM working set."""
    q = nb * hw
    patch = 9 * (4 * num) * q * 2        # reusable bf16 im2col scratch
    acts = 2 * (4 * num) * q * 4         # two live f32 activation maps
    masks = 9 * q * 4 + 9 * hw * 4       # in-kernel tiled masks + input copy
    x_in = 2 * nb * c * hw * 4           # double-buffered f32 input block
    out = 2 * num * q * 4                # double-buffered f32 output block
    return patch + acts + masks + x_in + out


def _pick_batch_block(n, c, hw, num, vmem_capacity):
    """Largest divisor of N that fits the VMEM budget, keeping grid >= 2."""
    budget = int(vmem_capacity * 0.45)
    # Keep at least 2 grid steps so v7x's two TensorCores both get work.
    nb = n if n < 2 else max(1, n // 2)
    while nb > 1 and (n % nb != 0 or _working_set_bytes(nb, c, hw, num) > budget):
        nb -= 1
    return nb


def fsfb_sp(x_nchw, kernel_params, num, mxu_dtype=jnp.bfloat16):
    n, c, h, w = x_nchw.shape
    vmem_cap = _vmem_capacity_bytes()
    nb = _pick_batch_block(n, c, h * w, num, vmem_cap)
    ws = _working_set_bytes(nb, c, h * w, num)
    vmem_limit = int(min(vmem_cap * 9 // 10, max(32 * 1024 * 1024, 2 * ws)))
    return _fsfb_sp_call(x_nchw, tuple(kernel_params), num, mxu_dtype, nb,
                         vmem_limit)


@partial(jax.jit, static_argnums=(2, 3, 4, 5))
def _fsfb_sp_call(x_nchw, kernel_params, num, mxu_dtype, nb, vmem_limit):
    n, c, h, w = x_nchw.shape
    hw = h * w
    q = nb * hw

    # NCHW kept; only a free trailing-dim flatten (no HBM transpose).
    x = x_nchw.reshape(n, c, hw).astype(jnp.float32)
    masks = jnp.asarray(_border_masks(h, w))                   # (9, HW) f32

    kernel = _make_kernel(nb, w, mxu_dtype)

    in_specs = [pl.BlockSpec((nb, c, hw), lambda i: (i, 0, 0)),
                pl.BlockSpec((9, hw), lambda i: (0, 0))]
    for p in kernel_params:                                    # all 2-D, whole
        in_specs.append(pl.BlockSpec(p.shape, lambda i: (0, 0)))

    out = pl.pallas_call(
        kernel,
        out_shape=jax.ShapeDtypeStruct((num, n * hw), jnp.float32),
        grid_spec=pltpu.PrefetchScalarGridSpec(
            num_scalar_prefetch=0,
            grid=(n // nb,),
            in_specs=in_specs,
            out_specs=pl.BlockSpec((num, q), lambda i: (0, i)),
            scratch_shapes=[pltpu.VMEM((9 * 4 * num, q), mxu_dtype)]),
        compiler_params=pltpu.CompilerParams(
            dimension_semantics=("parallel",),
            vmem_limit_bytes=vmem_limit),
    )(x, masks, *kernel_params)

    # torch.chunk(softmax, num, dim=1): free leading-axis slices + reshapes.
    return tuple(out[i].reshape(n, 1, h, w) for i in range(num))


def init_params(key, num, eps=1e-5):
    """Canonical parameters: per layer (w_hwio f32, bn_scale, bn_bias)."""
    dims = [(2, 2 * num), (2 * num, 4 * num), (4 * num, 4 * num),
            (4 * num, 2 * num), (2 * num, num)]
    keys = jax.random.split(key, 5 * len(dims))
    layers = []
    ki = 0
    for li, (ci, co) in enumerate(dims):
        w = 0.1 * jax.random.normal(keys[ki], (3, 3, ci, co), jnp.float32)
        ki += 1
        if li < 4:                         # last conv has no BN / ReLU
            gamma = 1.0 + 0.1 * jax.random.normal(keys[ki], (co,), jnp.float32); ki += 1
            beta = 0.1 * jax.random.normal(keys[ki], (co,), jnp.float32); ki += 1
            rmean = 0.1 * jax.random.normal(keys[ki], (co,), jnp.float32); ki += 1
            rvar = jnp.abs(1.0 + 0.1 * jax.random.normal(keys[ki], (co,), jnp.float32)); ki += 1
            scale = gamma / jnp.sqrt(rvar + eps)
            bias = beta - rmean * scale
            layers.append((w, scale, bias))
        else:
            ki += 4
            layers.append((w, None, None))
    return layers


def _fold_layers(layers):
    """Fold the per-channel BN scale into the conv weights (exact in f32)."""
    folded = []
    for (w, scale, bias) in layers:
        if scale is not None:
            w = w * scale[None, None, None, :]
        folded.append((w, bias))
    return folded


def prepare_kernel_params(layers, mxu_dtype=jnp.bfloat16):
    """Kernel params: (Co, 9*Ci) tap-major folded weights (MXU dtype) + (Co,1) bias."""
    flat = []
    for (w, bias) in _fold_layers(layers):
        kh, kw, ci, co = w.shape
        wt = jnp.transpose(w.reshape(kh * kw * ci, co)).astype(mxu_dtype)
        flat.append(wt)
        if bias is not None:
            flat.append(bias.reshape(co, 1).astype(jnp.float32))
    return flat


def fsfb_sp_reference(x_nchw, layers, num, mxu_dtype=jnp.bfloat16):
    """Pure-JAX reference (XLA convs), using the same folded MXU-dtype weights."""
    x = x_nchw.astype(jnp.float32)
    avg = jnp.mean(x, axis=1, keepdims=True)
    mx = jnp.max(x, axis=1, keepdims=True)
    h = jnp.transpose(jnp.concatenate([avg, mx], axis=1), (0, 2, 3, 1))  # NHWC

    for (w, bias) in _fold_layers(layers):
        h = jax.lax.conv_general_dilated(
            h.astype(mxu_dtype), w.astype(mxu_dtype), (1, 1), "SAME",
            dimension_numbers=("NHWC", "HWIO", "NHWC"),
            preferred_element_type=jnp.float32)
        if bias is not None:
            h = jnp.maximum(h + bias, 0.0)
    h = jax.nn.softmax(h, axis=-1)
    h = jnp.transpose(h, (0, 3, 1, 2))                                   # NCHW
    return tuple(h[:, i:i + 1] for i in range(num))


if __name__ == "__main__":
    key = jax.random.PRNGKey(0)
    kx, kp = jax.random.split(key)

    N, C, H, W = 2, 4, 16, 16
    num = 4
    mxu_dtype = jnp.bfloat16

    x = jax.random.normal(kx, (N, C, H, W), jnp.float32)
    layers = init_params(kp, num)
    kparams = prepare_kernel_params(layers, mxu_dtype)

    out = fsfb_sp(x, kparams, num, mxu_dtype)
    out = jax.block_until_ready(out)

    ref = fsfb_sp_reference(x, layers, num, mxu_dtype)
    assert len(out) == num
    for o, r in zip(out, ref):
        assert o.shape == (N, 1, H, W), o.shape
        err = float(jnp.max(jnp.abs(o - r)))
        assert jnp.allclose(o, r, atol=5e-3, rtol=5e-3), err

    print("KERNEL_OK")
</pallas_src>

<mosaic_0001>
module attributes {stable_mosaic.version = 11 : i64} {
  func.func @kernel(%arg0: i32, %arg1: memref<1x4x256xf32, #tpu.memory_space<vmem>>, %arg2: memref<9x256xf32, #tpu.memory_space<vmem>>, %arg3: memref<8x18xbf16, #tpu.memory_space<vmem>>, %arg4: memref<8x1xf32, #tpu.memory_space<vmem>>, %arg5: memref<16x72xbf16, #tpu.memory_space<vmem>>, %arg6: memref<16x1xf32, #tpu.memory_space<vmem>>, %arg7: memref<16x144xbf16, #tpu.memory_space<vmem>>, %arg8: memref<16x1xf32, #tpu.memory_space<vmem>>, %arg9: memref<8x144xbf16, #tpu.memory_space<vmem>>, %arg10: memref<8x1xf32, #tpu.memory_space<vmem>>, %arg11: memref<4x72xbf16, #tpu.memory_space<vmem>>, %arg12: memref<4x256xf32, #tpu.memory_space<vmem>>, %arg13: memref<144x256xbf16, #tpu.memory_space<vmem>>) attributes {dimension_semantics = [#tpu.dimension_semantics<parallel>], iteration_bounds = array<i64: 2>, scalar_prefetch = 0 : i64, scratch_operands = 1 : i64, tpu.core_type = #tpu.core_type<tc>, window_params = [{transform_indices = @transform_0, window_bounds = array<i64: 1, 4, 256>}, {pipeline_mode = #tpu.pipeline_mode<synchronous>, transform_indices = @transform_1, window_bounds = array<i64: 9, 256>}, {pipeline_mode = #tpu.pipeline_mode<synchronous>, transform_indices = @transform_2, window_bounds = array<i64: 8, 18>}, {pipeline_mode = #tpu.pipeline_mode<synchronous>, transform_indices = @transform_3, window_bounds = array<i64: 8, 1>}, {pipeline_mode = #tpu.pipeline_mode<synchronous>, transform_indices = @transform_4, window_bounds = array<i64: 16, 72>}, {pipeline_mode = #tpu.pipeline_mode<synchronous>, transform_indices = @transform_5, window_bounds = array<i64: 16, 1>}, {pipeline_mode = #tpu.pipeline_mode<synchronous>, transform_indices = @transform_6, window_bounds = array<i64: 16, 144>}, {pipeline_mode = #tpu.pipeline_mode<synchronous>, transform_indices = @transform_7, window_bounds = array<i64: 16, 1>}, {pipeline_mode = #tpu.pipeline_mode<synchronous>, transform_indices = @transform_8, window_bounds = array<i64: 8, 144>}, {pipeline_mode = #tpu.pipeline_mode<synchronous>, transform_indices = @transform_9, window_bounds = array<i64: 8, 1>}, {pipeline_mode = #tpu.pipeline_mode<synchronous>, transform_indices = @transform_10, window_bounds = array<i64: 4, 72>}, {transform_indices = @transform_11, window_bounds = array<i64: 4, 256>}]} {
    %c0 = arith.constant 0 : index
    %c0_0 = arith.constant 0 : index
    %0 = vector.load %arg2[%c0, %c0_0] : memref<9x256xf32, #tpu.memory_space<vmem>>, vector<9x256xf32>
    %1 = vector.extract_strided_slice %0 {offsets = [0, 0], sizes = [1, 256], strides = [1, 1]} : vector<9x256xf32> to vector<1x256xf32>
    %2 = vector.extract_strided_slice %0 {offsets = [1, 0], sizes = [1, 256], strides = [1, 1]} : vector<9x256xf32> to vector<1x256xf32>
    %3 = vector.extract_strided_slice %0 {offsets = [2, 0], sizes = [1, 256], strides = [1, 1]} : vector<9x256xf32> to vector<1x256xf32>
    %4 = vector.extract_strided_slice %0 {offsets = [3, 0], sizes = [1, 256], strides = [1, 1]} : vector<9x256xf32> to vector<1x256xf32>
    %5 = vector.extract_strided_slice %0 {offsets = [5, 0], sizes = [1, 256], strides = [1, 1]} : vector<9x256xf32> to vector<1x256xf32>
    %6 = vector.extract_strided_slice %0 {offsets = [6, 0], sizes = [1, 256], strides = [1, 1]} : vector<9x256xf32> to vector<1x256xf32>
    %7 = vector.extract_strided_slice %0 {offsets = [7, 0], sizes = [1, 256], strides = [1, 1]} : vector<9x256xf32> to vector<1x256xf32>
    %8 = vector.extract_strided_slice %0 {offsets = [8, 0], sizes = [1, 256], strides = [1, 1]} : vector<9x256xf32> to vector<1x256xf32>
    %c0_1 = arith.constant 0 : index
    %c0_2 = arith.constant 0 : index
    %c0_3 = arith.constant 0 : index
    %9 = vector.load %arg1[%c0_1, %c0_2, %c0_3] : memref<1x4x256xf32, #tpu.memory_space<vmem>>, vector<1x4x256xf32>
    %10 = vector.shape_cast %9 : vector<1x4x256xf32> to vector<4x256xf32>
    %cst = arith.constant dense<0.000000e+00> : vector<256xf32>
    %11 = vector.multi_reduction <add>, %10, %cst [0] : vector<4x256xf32> to vector<256xf32>
    %12 = vector.shape_cast %11 : vector<256xf32> to vector<1x256xf32>
    %cst_4 = arith.constant 4.000000e+00 : f32
    %13 = vector.broadcast %cst_4 : f32 to vector<1x256xf32>
    %14 = arith.divf %12, %13 : vector<1x256xf32>
    %cst_5 = arith.constant dense<0xFF800000> : vector<256xf32>
    %15 = vector.multi_reduction <maximumf>, %10, %cst_5 [0] : vector<4x256xf32> to vector<256xf32>
    %16 = vector.shape_cast %15 : vector<256xf32> to vector<1x256xf32>
    %17 = tpu.concatenate %14, %16 in 0 : vector<1x256xf32>, vector<1x256xf32> -> vector<2x256xf32>
    %c17_i32 = arith.constant 17 : i32
    %18 = tpu.dynamic_rotate %17 by %c17_i32 dim 1 : vector<2x256xf32>, i32 -> vector<2x256xf32>
    %19 = vector.broadcast %1 : vector<1x256xf32> to vector<2x256xf32>
    %20 = arith.mulf %18, %19 : vector<2x256xf32>
    %21 = arith.truncf %20 : vector<2x256xf32> to vector<2x256xbf16>
    %c0_6 = arith.constant 0 : index
    %c0_7 = arith.constant 0 : index
    %22 = vector.load %arg13[%c0_6, %c0_7] : memref<144x256xbf16, #tpu.memory_space<vmem>>, vector<2x256xbf16>
    tpu.vector_store %arg13[%c0_6, %c0_7], %21 {strides = array<i32>} : memref<144x256xbf16, #tpu.memory_space<vmem>>, vector<2x256xbf16>,
    %c16_i32 = arith.constant 16 : i32
    %23 = tpu.dynamic_rotate %17 by %c16_i32 dim 1 : vector<2x256xf32>, i32 -> vector<2x256xf32>
    %24 = vector.broadcast %2 : vector<1x256xf32> to vector<2x256xf32>
    %25 = arith.mulf %23, %24 : vector<2x256xf32>
    %26 = arith.truncf %25 : vector<2x256xf32> to vector<2x256xbf16>
    %c2 = arith.constant 2 : index
    %c0_8 = arith.constant 0 : index
    %27 = vector.load %arg13[%c2, %c0_8] : memref<144x256xbf16, #tpu.memory_space<vmem>>, vector<2x256xbf16>
    tpu.vector_store %arg13[%c2, %c0_8], %26 {strides = array<i32>} : memref<144x256xbf16, #tpu.memory_space<vmem>>, vector<2x256xbf16>,
    %c15_i32 = arith.constant 15 : i32
    %28 = tpu.dynamic_rotate %17 by %c15_i32 dim 1 : vector<2x256xf32>, i32 -> vector<2x256xf32>
    %29 = vector.broadcast %3 : vector<1x256xf32> to vector<2x256xf32>
    %30 = arith.mulf %28, %29 : vector<2x256xf32>
    %31 = arith.truncf %30 : vector<2x256xf32> to vector<2x256xbf16>
    %c4 = arith.constant 4 : index
    %c0_9 = arith.constant 0 : index
    %32 = vector.load %arg13[%c4, %c0_9] : memref<144x256xbf16, #tpu.memory_space<vmem>>, vector<2x256xbf16>
    tpu.vector_store %arg13[%c4, %c0_9], %31 {strides = array<i32>} : memref<144x256xbf16, #tpu.memory_space<vmem>>, vector<2x256xbf16>,
    %c1_i32 = arith.constant 1 : i32
    %33 = tpu.dynamic_rotate %17 by %c1_i32 dim 1 : vector<2x256xf32>, i32 -> vector<2x256xf32>
    %34 = vector.broadcast %4 : vector<1x256xf32> to vector<2x256xf32>
    %35 = arith.mulf %33, %34 : vector<2x256xf32>
    %36 = arith.truncf %35 : vector<2x256xf32> to vector<2x256xbf16>
    %c6 = arith.constant 6 : index
    %c0_10 = arith.constant 0 : index
    %37 = vector.load %arg13[%c6, %c0_10] : memref<144x256xbf16, #tpu.memory_space<vmem>>, vector<2x256xbf16>
    tpu.vector_store %arg13[%c6, %c0_10], %36 {strides = array<i32>} : memref<144x256xbf16, #tpu.memory_space<vmem>>, vector<2x256xbf16>,
    %38 = arith.truncf %17 : vector<2x256xf32> to vector<2x256xbf16>
    %c8 = arith.constant 8 : index
    %c0_11 = arith.constant 0 : index
    %39 = vector.load %arg13[%c8, %c0_11] : memref<144x256xbf16, #tpu.memory_space<vmem>>, vector<2x256xbf16>
    tpu.vector_store %arg13[%c8, %c0_11], %38 {strides = array<i32>} : memref<144x256xbf16, #tpu.memory_space<vmem>>, vector<2x256xbf16>,
    %c255_i32 = arith.constant 255 : i32
    %40 = tpu.dynamic_rotate %17 by %c255_i32 dim 1 : vector<2x256xf32>, i32 -> vector<2x256xf32>
    %41 = vector.broadcast %5 : vector<1x256xf32> to vector<2x256xf32>
    %42 = arith.mulf %40, %41 : vector<2x256xf32>
    %43 = arith.truncf %42 : vector<2x256xf32> to vector<2x256xbf16>
    %c10 = arith.constant 10 : index
    %c0_12 = arith.constant 0 : index
    %44 = vector.load %arg13[%c10, %c0_12] : memref<144x256xbf16, #tpu.memory_space<vmem>>, vector<2x256xbf16>
    tpu.vector_store %arg13[%c10, %c0_12], %43 {strides = array<i32>} : memref<144x256xbf16, #tpu.memory_space<vmem>>, vector<2x256xbf16>,
    %c241_i32 = arith.constant 241 : i32
    %45 = tpu.dynamic_rotate %17 by %c241_i32 dim 1 : vector<2x256xf32>, i32 -> vector<2x256xf32>
    %46 = vector.broadcast %6 : vector<1x256xf32> to vector<2x256xf32>
    %47 = arith.mulf %45, %46 : vector<2x256xf32>
    %48 = arith.truncf %47 : vector<2x256xf32> to vector<2x256xbf16>
    %c12 = arith.constant 12 : index
    %c0_13 = arith.constant 0 : index
    %49 = vector.load %arg13[%c12, %c0_13] : memref<144x256xbf16, #tpu.memory_space<vmem>>, vector<2x256xbf16>
    tpu.vector_store %arg13[%c12, %c0_13], %48 {strides = array<i32>} : memref<144x256xbf16, #tpu.memory_space<vmem>>, vector<2x256xbf16>,
    %c240_i32 = arith.constant 240 : i32
    %50 = tpu.dynamic_rotate %17 by %c240_i32 dim 1 : vector<2x256xf32>, i32 -> vector<2x256xf32>
    %51 = vector.broadcast %7 : vector<1x256xf32> to vector<2x256xf32>
    %52 = arith.mulf %50, %51 : vector<2x256xf32>
    %53 = arith.truncf %52 : vector<2x256xf32> to vector<2x256xbf16>
    %c14 = arith.constant 14 : index
    %c0_14 = arith.constant 0 : index
    %54 = vector.load %arg13[%c14, %c0_14] : memref<144x256xbf16, #tpu.memory_space<vmem>>, vector<2x256xbf16>
    tpu.vector_store %arg13[%c14, %c0_14], %53 {strides = array<i32>} : memref<144x256xbf16, #tpu.memory_space<vmem>>, vector<2x256xbf16>,
    %c239_i32 = arith.constant 239 : i32
    %55 = tpu.dynamic_rotate %17 by %c239_i32 dim 1 : vector<2x256xf32>, i32 -> vector<2x256xf32>
    %56 = vector.broadcast %8 : vector<1x256xf32> to vector<2x256xf32>
    %57 = arith.mulf %55, %56 : vector<2x256xf32>
    %58 = arith.truncf %57 : vector<2x256xf32> to vector<2x256xbf16>
    %c16 = arith.constant 16 : index
    %c0_15 = arith.constant 0 : index
    %59 = vector.load %arg13[%c16, %c0_15] : memref<144x256xbf16, #tpu.memory_space<vmem>>, vector<2x256xbf16>
    tpu.vector_store %arg13[%c16, %c0_15], %58 {strides = array<i32>} : memref<144x256xbf16, #tpu.memory_space<vmem>>, vector<2x256xbf16>,
    %c0_16 = arith.constant 0 : index
    %c0_17 = arith.constant 0 : index
    %60 = vector.load %arg13[%c0_16, %c0_17] : memref<144x256xbf16, #tpu.memory_space<vmem>>, vector<18x256xbf16>
    %c0_18 = arith.constant 0 : index
    %c0_19 = arith.constant 0 : index
    %61 = vector.load %arg3[%c0_18, %c0_19] : memref<8x18xbf16, #tpu.memory_space<vmem>>, vector<8x18xbf16>
    %cst_20 = arith.constant dense<0.000000e+00> : vector<8x256xf32>
    %62 = tpu.matmul %61, %60, %cst_20 {dimension_numbers = #tpu.dot_dimension_numbers<[1], [0], [0], [1], [0, 0, 1, 1], [], []>} : vector<8x18xbf16>, vector<18x256xbf16>, vector<8x256xf32> -> vector<8x256xf32>
    %c0_21 = arith.constant 0 : index
    %c0_22 = arith.constant 0 : index
    %63 = vector.load %arg4[%c0_21, %c0_22] : memref<8x1xf32, #tpu.memory_space<vmem>>, vector<8x1xf32>
    %64 = vector.broadcast %63 : vector<8x1xf32> to vector<8x256xf32>
    %65 = arith.addf %62, %64 : vector<8x256xf32>
    %cst_23 = arith.constant 0.000000e+00 : f32
    %66 = vector.broadcast %cst_23 : f32 to vector<8x256xf32>
    %67 = arith.maximumf %65, %66 : vector<8x256xf32>
    %c17_i32_24 = arith.constant 17 : i32
    %68 = tpu.dynamic_rotate %67 by %c17_i32_24 dim 1 : vector<8x256xf32>, i32 -> vector<8x256xf32>
    %69 = vector.broadcast %1 : vector<1x256xf32> to vector<8x256xf32>
    %70 = arith.mulf %68, %69 : vector<8x256xf32>
    %71 = arith.truncf %70 : vector<8x256xf32> to vector<8x256xbf16>
    %c0_25 = arith.constant 0 : index
    %c0_26 = arith.constant 0 : index
    %72 = vector.load %arg13[%c0_25, %c0_26] : memref<144x256xbf16, #tpu.memory_space<vmem>>, vector<8x256xbf16>
    tpu.vector_store %arg13[%c0_25, %c0_26], %71 {strides = array<i32>} : memref<144x256xbf16, #tpu.memory_space<vmem>>, vector<8x256xbf16>,
    %c16_i32_27 = arith.constant 16 : i32
    %73 = tpu.dynamic_rotate %67 by %c16_i32_27 dim 1 : vector<8x256xf32>, i32 -> vector<8x256xf32>
    %74 = vector.broadcast %2 : vector<1x256xf32> to vector<8x256xf32>
    %75 = arith.mulf %73, %74 : vector<8x256xf32>
    %76 = arith.truncf %75 : vector<8x256xf32> to vector<8x256xbf16>
    %c8_28 = arith.constant 8 : index
    %c0_29 = arith.constant 0 : index
    %77 = vector.load %arg13[%c8_28, %c0_29] : memref<144x256xbf16, #tpu.memory_space<vmem>>, vector<8x256xbf16>
    tpu.vector_store %arg13[%c8_28, %c0_29], %76 {strides = array<i32>} : memref<144x256xbf16, #tpu.memory_space<vmem>>, vector<8x256xbf16>,
    %c15_i32_30 = arith.constant 15 : i32
    %78 = tpu.dynamic_rotate %67 by %c15_i32_30 dim 1 : vector<8x256xf32>, i32 -> vector<8x256xf32>
    %79 = vector.broadcast %3 : vector<1x256xf32> to vector<8x256xf32>
    %80 = arith.mulf %78, %79 : vector<8x256xf32>
    %81 = arith.truncf %80 : vector<8x256xf32> to vector<8x256xbf16>
    %c16_31 = arith.constant 16 : index
    %c0_32 = arith.constant 0 : index
    %82 = vector.load %arg13[%c16_31, %c0_32] : memref<144x256xbf16, #tpu.memory_space<vmem>>, vector<8x256xbf16>
    tpu.vector_store %arg13[%c16_31, %c0_32], %81 {strides = array<i32>} : memref<144x256xbf16, #tpu.memory_space<vmem>>, vector<8x256xbf16>,
    %c1_i32_33 = arith.constant 1 : i32
    %83 = tpu.dynamic_rotate %67 by %c1_i32_33 dim 1 : vector<8x256xf32>, i32 -> vector<8x256xf32>
    %84 = vector.broadcast %4 : vector<1x256xf32> to vector<8x256xf32>
    %85 = arith.mulf %83, %84 : vector<8x256xf32>
    %86 = arith.truncf %85 : vector<8x256xf32> to vector<8x256xbf16>
    %c24 = arith.constant 24 : index
    %c0_34 = arith.constant 0 : index
    %87 = vector.load %arg13[%c24, %c0_34] : memref<144x256xbf16, #tpu.memory_space<vmem>>, vector<8x256xbf16>
    tpu.vector_store %arg13[%c24, %c0_34], %86 {strides = array<i32>} : memref<144x256xbf16, #tpu.memory_space<vmem>>, vector<8x256xbf16>,
    %88 = arith.truncf %67 : vector<8x256xf32> to vector<8x256xbf16>
    %c32 = arith.constant 32 : index
    %c0_35 = arith.constant 0 : index
    %89 = vector.load %arg13[%c32, %c0_35] : memref<144x256xbf16, #tpu.memory_space<vmem>>, vector<8x256xbf16>
    tpu.vector_store %arg13[%c32, %c0_35], %88 {strides = array<i32>} : memref<144x256xbf16, #tpu.memory_space<vmem>>, vector<8x256xbf16>,
    %c255_i32_36 = arith.constant 255 : i32
    %90 = tpu.dynamic_rotate %67 by %c255_i32_36 dim 1 : vector<8x256xf32>, i32 -> vector<8x256xf32>
    %91 = vector.broadcast %5 : vector<1x256xf32> to vector<8x256xf32>
    %92 = arith.mulf %90, %91 : vector<8x256xf32>
    %93 = arith.truncf %92 : vector<8x256xf32> to vector<8x256xbf16>
    %c40 = arith.constant 40 : index
    %c0_37 = arith.constant 0 : index
    %94 = vector.load %arg13[%c40, %c0_37] : memref<144x256xbf16, #tpu.memory_space<vmem>>, vector<8x256xbf16>
    tpu.vector_store %arg13[%c40, %c0_37], %93 {strides = array<i32>} : memref<144x256xbf16, #tpu.memory_space<vmem>>, vector<8x256xbf16>,
    %c241_i32_38 = arith.constant 241 : i32
    %95 = tpu.dynamic_rotate %67 by %c241_i32_38 dim 1 : vector<8x256xf32>, i32 -> vector<8x256xf32>
    %96 = vector.broadcast %6 : vector<1x256xf32> to vector<8x256xf32>
    %97 = arith.mulf %95, %96 : vector<8x256xf32>
    %98 = arith.truncf %97 : vector<8x256xf32> to vector<8x256xbf16>
    %c48 = arith.constant 48 : index
    %c0_39 = arith.constant 0 : index
    %99 = vector.load %arg13[%c48, %c0_39] : memref<144x256xbf16, #tpu.memory_space<vmem>>, vector<8x256xbf16>
    tpu.vector_store %arg13[%c48, %c0_39], %98 {strides = array<i32>} : memref<144x256xbf16, #tpu.memory_space<vmem>>, vector<8x256xbf16>,
    %c240_i32_40 = arith.constant 240 : i32
    %100 = tpu.dynamic_rotate %67 by %c240_i32_40 dim 1 : vector<8x256xf32>, i32 -> vector<8x256xf32>
    %101 = vector.broadcast %7 : vector<1x256xf32> to vector<8x256xf32>
    %102 = arith.mulf %100, %101 : vector<8x256xf32>
    %103 = arith.truncf %102 : vector<8x256xf32> to vector<8x256xbf16>
    %c56 = arith.constant 56 : index
    %c0_41 = arith.constant 0 : index
    %104 = vector.load %arg13[%c56, %c0_41] : memref<144x256xbf16, #tpu.memory_space<vmem>>, vector<8x256xbf16>
    tpu.vector_store %arg13[%c56, %c0_41], %103 {strides = array<i32>} : memref<144x256xbf16, #tpu.memory_space<vmem>>, vector<8x256xbf16>,
    %c239_i32_42 = arith.constant 239 : i32
    %105 = tpu.dynamic_rotate %67 by %c239_i32_42 dim 1 : vector<8x256xf32>, i32 -> vector<8x256xf32>
    %106 = vector.broadcast %8 : vector<1x256xf32> to vector<8x256xf32>
    %107 = arith.mulf %105, %106 : vector<8x256xf32>
    %108 = arith.truncf %107 : vector<8x256xf32> to vector<8x256xbf16>
    %c64 = arith.constant 64 : index
    %c0_43 = arith.constant 0 : index
    %109 = vector.load %arg13[%c64, %c0_43] : memref<144x256xbf16, #tpu.memory_space<vmem>>, vector<8x256xbf16>
    tpu.vector_store %arg13[%c64, %c0_43], %108 {strides = array<i32>} : memref<144x256xbf16, #tpu.memory_space<vmem>>, vector<8x256xbf16>,
    %c0_44 = arith.constant 0 : index
    %c0_45 = arith.constant 0 : index
    %110 = vector.load %arg13[%c0_44, %c0_45] : memref<144x256xbf16, #tpu.memory_space<vmem>>, vector<72x256xbf16>
    %c0_46 = arith.constant 0 : index
    %c0_47 = arith.constant 0 : index
    %111 = vector.load %arg5[%c0_46, %c0_47] : memref<16x72xbf16, #tpu.memory_space<vmem>>, vector<16x72xbf16>
    %cst_48 = arith.constant dense<0.000000e+00> : vector<16x256xf32>
    %112 = tpu.matmul %111, %110, %cst_48 {dimension_numbers = #tpu.dot_dimension_numbers<[1], [0], [0], [1], [0, 0, 1, 1], [], []>} : vector<16x72xbf16>, vector<72x256xbf16>, vector<16x256xf32> -> vector<16x256xf32>
    %c0_49 = arith.constant 0 : index
    %c0_50 = arith.constant 0 : index
    %113 = vector.load %arg6[%c0_49, %c0_50] : memref<16x1xf32, #tpu.memory_space<vmem>>, vector<16x1xf32>
    %114 = vector.broadcast %113 : vector<16x1xf32> to vector<16x256xf32>
    %115 = arith.addf %112, %114 : vector<16x256xf32>
    %cst_51 = arith.constant 0.000000e+00 : f32
    %116 = vector.broadcast %cst_51 : f32 to vector<16x256xf32>
    %117 = arith.maximumf %115, %116 : vector<16x256xf32>
    %c17_i32_52 = arith.constant 17 : i32
    %118 = tpu.dynamic_rotate %117 by %c17_i32_52 dim 1 : vector<16x256xf32>, i32 -> vector<16x256xf32>
    %119 = vector.broadcast %1 : vector<1x256xf32> to vector<16x256xf32>
    %120 = arith.mulf %118, %119 : vector<16x256xf32>
    %121 = arith.truncf %120 : vector<16x256xf32> to vector<16x256xbf16>
    %c0_53 = arith.constant 0 : index
    %c0_54 = arith.constant 0 : index
    %122 = vector.load %arg13[%c0_53, %c0_54] : memref<144x256xbf16, #tpu.memory_space<vmem>>, vector<16x256xbf16>
    tpu.vector_store %arg13[%c0_53, %c0_54], %121 {strides = array<i32>} : memref<144x256xbf16, #tpu.memory_space<vmem>>, vector<16x256xbf16>,
    %c16_i32_55 = arith.constant 16 : i32
    %123 = tpu.dynamic_rotate %117 by %c16_i32_55 dim 1 : vector<16x256xf32>, i32 -> vector<16x256xf32>
    %124 = vector.broadcast %2 : vector<1x256xf32> to vector<16x256xf32>
    %125 = arith.mulf %123, %124 : vector<16x256xf32>
    %126 = arith.truncf %125 : vector<16x256xf32> to vector<16x256xbf16>
    %c16_56 = arith.constant 16 : index
    %c0_57 = arith.constant 0 : index
    %127 = vector.load %arg13[%c16_56, %c0_57] : memref<144x256xbf16, #tpu.memory_space<vmem>>, vector<16x256xbf16>
    tpu.vector_store %arg13[%c16_56, %c0_57], %126 {strides = array<i32>} : memref<144x256xbf16, #tpu.memory_space<vmem>>, vector<16x256xbf16>,
    %c15_i32_58 = arith.constant 15 : i32
    %128 = tpu.dynamic_rotate %117 by %c15_i32_58 dim 1 : vector<16x256xf32>, i32 -> vector<16x256xf32>
    %129 = vector.broadcast %3 : vector<1x256xf32> to vector<16x256xf32>
    %130 = arith.mulf %128, %129 : vector<16x256xf32>
    %131 = arith.truncf %130 : vector<16x256xf32> to vector<16x256xbf16>
    %c32_59 = arith.constant 32 : index
    %c0_60 = arith.constant 0 : index
    %132 = vector.load %arg13[%c32_59, %c0_60] : memref<144x256xbf16, #tpu.memory_space<vmem>>, vector<16x256xbf16>
    tpu.vector_store %arg13[%c32_59, %c0_60], %131 {strides = array<i32>} : memref<144x256xbf16, #tpu.memory_space<vmem>>, vector<16x256xbf16>,
    %c1_i32_61 = arith.constant 1 : i32
    %133 = tpu.dynamic_rotate %117 by %c1_i32_61 dim 1 : vector<16x256xf32>, i32 -> vector<16x256xf32>
    %134 = vector.broadcast %4 : vector<1x256xf32> to vector<16x256xf32>
    %135 = arith.mulf %133, %134 : vector<16x256xf32>
    %136 = arith.truncf %135 : vector<16x256xf32> to vector<16x256xbf16>
    %c48_62 = arith.constant 48 : index
    %c0_63 = arith.constant 0 : index
    %137 = vector.load %arg13[%c48_62, %c0_63] : memref<144x256xbf16, #tpu.memory_space<vmem>>, vector<16x256xbf16>
    tpu.vector_store %arg13[%c48_62, %c0_63], %136 {strides = array<i32>} : memref<144x256xbf16, #tpu.memory_space<vmem>>, vector<16x256xbf16>,
    %138 = arith.truncf %117 : vector<16x256xf32> to vector<16x256xbf16>
    %c64_64 = arith.constant 64 : index
    %c0_65 = arith.constant 0 : index
    %139 = vector.load %arg13[%c64_64, %c0_65] : memref<144x256xbf16, #tpu.memory_space<vmem>>, vector<16x256xbf16>
    tpu.vector_store %arg13[%c64_64, %c0_65], %138 {strides = array<i32>} : memref<144x256xbf16, #tpu.memory_space<vmem>>, vector<16x256xbf16>,
    %c255_i32_66 = arith.constant 255 : i32
    %140 = tpu.dynamic_rotate %117 by %c255_i32_66 dim 1 : vector<16x256xf32>, i32 -> vector<16x256xf32>
    %141 = vector.broadcast %5 : vector<1x256xf32> to vector<16x256xf32>
    %142 = arith.mulf %140, %141 : vector<16x256xf32>
    %143 = arith.truncf %142 : vector<16x256xf32> to vector<16x256xbf16>
    %c80 = arith.constant 80 : index
    %c0_67 = arith.constant 0 : index
    %144 = vector.load %arg13[%c80, %c0_67] : memref<144x256xbf16, #tpu.memory_space<vmem>>, vector<16x256xbf16>
    tpu.vector_store %arg13[%c80, %c0_67], %143 {strides = array<i32>} : memref<144x256xbf16, #tpu.memory_space<vmem>>, vector<16x256xbf16>,
    %c241_i32_68 = arith.constant 241 : i32
    %145 = tpu.dynamic_rotate %117 by %c241_i32_68 dim 1 : vector<16x256xf32>, i32 -> vector<16x256xf32>
    %146 = vector.broadcast %6 : vector<1x256xf32> to vector<16x256xf32>
    %147 = arith.mulf %145, %146 : vector<16x256xf32>
    %148 = arith.truncf %147 : vector<16x256xf32> to vector<16x256xbf16>
    %c96 = arith.constant 96 : index
    %c0_69 = arith.constant 0 : index
    %149 = vector.load %arg13[%c96, %c0_69] : memref<144x256xbf16, #tpu.memory_space<vmem>>, vector<16x256xbf16>
    tpu.vector_store %arg13[%c96, %c0_69], %148 {strides = array<i32>} : memref<144x256xbf16, #tpu.memory_space<vmem>>, vector<16x256xbf16>,
    %c240_i32_70 = arith.constant 240 : i32
    %150 = tpu.dynamic_rotate %117 by %c240_i32_70 dim 1 : vector<16x256xf32>, i32 -> vector<16x256xf32>
    %151 = vector.broadcast %7 : vector<1x256xf32> to vector<16x256xf32>
    %152 = arith.mulf %150, %151 : vector<16x256xf32>
    %153 = arith.truncf %152 : vector<16x256xf32> to vector<16x256xbf16>
    %c112 = arith.constant 112 : index
    %c0_71 = arith.constant 0 : index
    %154 = vector.load %arg13[%c112, %c0_71] : memref<144x256xbf16, #tpu.memory_space<vmem>>, vector<16x256xbf16>
    tpu.vector_store %arg13[%c112, %c0_71], %153 {strides = array<i32>} : memref<144x256xbf16, #tpu.memory_space<vmem>>, vector<16x256xbf16>,
    %c239_i32_72 = arith.constant 239 : i32
    %155 = tpu.dynamic_rotate %117 by %c239_i32_72 dim 1 : vector<16x256xf32>, i32 -> vector<16x256xf32>
    %156 = vector.broadcast %8 : vector<1x256xf32> to vector<16x256xf32>
    %157 = arith.mulf %155, %156 : vector<16x256xf32>
    %158 = arith.truncf %157 : vector<16x256xf32> to vector<16x256xbf16>
    %c128 = arith.constant 128 : index
    %c0_73 = arith.constant 0 : index
    %159 = vector.load %arg13[%c128, %c0_73] : memref<144x256xbf16, #tpu.memory_space<vmem>>, vector<16x256xbf16>
    tpu.vector_store %arg13[%c128, %c0_73], %158 {strides = array<i32>} : memref<144x256xbf16, #tpu.memory_space<vmem>>, vector<16x256xbf16>,
    %c0_74 = arith.constant 0 : index
    %c0_75 = arith.constant 0 : index
    %160 = vector.load %arg13[%c0_74, %c0_75] : memref<144x256xbf16, #tpu.memory_space<vmem>>, vector<144x256xbf16>
    %c0_76 = arith.constant 0 : index
    %c0_77 = arith.constant 0 : index
    %161 = vector.load %arg7[%c0_76, %c0_77] : memref<16x144xbf16, #tpu.memory_space<vmem>>, vector<16x144xbf16>
    %cst_78 = arith.constant dense<0.000000e+00> : vector<16x256xf32>
    %162 = tpu.matmul %161, %160, %cst_78 {dimension_numbers = #tpu.dot_dimension_numbers<[1], [0], [0], [1], [0, 0, 1, 1], [], []>} : vector<16x144xbf16>, vector<144x256xbf16>, vector<16x256xf32> -> vector<16x256xf32>
    %c0_79 = arith.constant 0 : index
    %c0_80 = arith.constant 0 : index
    %163 = vector.load %arg8[%c0_79, %c0_80] : memref<16x1xf32, #tpu.memory_space<vmem>>, vector<16x1xf32>
    %164 = vector.broadcast %163 : vector<16x1xf32> to vector<16x256xf32>
    %165 = arith.addf %162, %164 : vector<16x256xf32>
    %cst_81 = arith.constant 0.000000e+00 : f32
    %166 = vector.broadcast %cst_81 : f32 to vector<16x256xf32>
    %167 = arith.maximumf %165, %166 : vector<16x256xf32>
    %c17_i32_82 = arith.constant 17 : i32
    %168 = tpu.dynamic_rotate %167 by %c17_i32_82 dim 1 : vector<16x256xf32>, i32 -> vector<16x256xf32>
    %169 = vector.broadcast %1 : vector<1x256xf32> to vector<16x256xf32>
    %170 = arith.mulf %168, %169 : vector<16x256xf32>
    %171 = arith.truncf %170 : vector<16x256xf32> to vector<16x256xbf16>
    %c0_83 = arith.constant 0 : index
    %c0_84 = arith.constant 0 : index
    %172 = vector.load %arg13[%c0_83, %c0_84] : memref<144x256xbf16, #tpu.memory_space<vmem>>, vector<16x256xbf16>
    tpu.vector_store %arg13[%c0_83, %c0_84], %171 {strides = array<i32>} : memref<144x256xbf16, #tpu.memory_space<vmem>>, vector<16x256xbf16>,
    %c16_i32_85 = arith.constant 16 : i32
    %173 = tpu.dynamic_rotate %167 by %c16_i32_85 dim 1 : vector<16x256xf32>, i32 -> vector<16x256xf32>
    %174 = vector.broadcast %2 : vector<1x256xf32> to vector<16x256xf32>
    %175 = arith.mulf %173, %174 : vector<16x256xf32>
    %176 = arith.truncf %175 : vector<16x256xf32> to vector<16x256xbf16>
    %c16_86 = arith.constant 16 : index
    %c0_87 = arith.constant 0 : index
    %177 = vector.load %arg13[%c16_86, %c0_87] : memref<144x256xbf16, #tpu.memory_space<vmem>>, vector<16x256xbf16>
    tpu.vector_store %arg13[%c16_86, %c0_87], %176 {strides = array<i32>} : memref<144x256xbf16, #tpu.memory_space<vmem>>, vector<16x256xbf16>,
    %c15_i32_88 = arith.constant 15 : i32
    %178 = tpu.dynamic_rotate %167 by %c15_i32_88 dim 1 : vector<16x256xf32>, i32 -> vector<16x256xf32>
    %179 = vector.broadcast %3 : vector<1x256xf32> to vector<16x256xf32>
    %180 = arith.mulf %178, %179 : vector<16x256xf32>
    %181 = arith.truncf %180 : vector<16x256xf32> to vector<16x256xbf16>
    %c32_89 = arith.constant 32 : index
    %c0_90 = arith.constant 0 : index
    %182 = vector.load %arg13[%c32_89, %c0_90] : memref<144x256xbf16, #tpu.memory_space<vmem>>, vector<16x256xbf16>
    tpu.vector_store %arg13[%c32_89, %c0_90], %181 {strides = array<i32>} : memref<144x256xbf16, #tpu.memory_space<vmem>>, vector<16x256xbf16>,
    %c1_i32_91 = arith.constant 1 : i32
    %183 = tpu.dynamic_rotate %167 by %c1_i32_91 dim 1 : vector<16x256xf32>, i32 -> vector<16x256xf32>
    %184 = vector.broadcast %4 : vector<1x256xf32> to vector<16x256xf32>
    %185 = arith.mulf %183, %184 : vector<16x256xf32>
    %186 = arith.truncf %185 : vector<16x256xf32> to vector<16x256xbf16>
    %c48_92 = arith.constant 48 : index
    %c0_93 = arith.constant 0 : index
    %187 = vector.load %arg13[%c48_92, %c0_93] : memref<144x256xbf16, #tpu.memory_space<vmem>>, vector<16x256xbf16>
    tpu.vector_store %arg13[%c48_92, %c0_93], %186 {strides = array<i32>} : memref<144x256xbf16, #tpu.memory_space<vmem>>, vector<16x256xbf16>,
    %188 = arith.truncf %167 : vector<16x256xf32> to vector<16x256xbf16>
    %c64_94 = arith.constant 64 : index
    %c0_95 = arith.constant 0 : index
    %189 = vector.load %arg13[%c64_94, %c0_95] : memref<144x256xbf16, #tpu.memory_space<vmem>>, vector<16x256xbf16>
    tpu.vector_store %arg13[%c64_94, %c0_95], %188 {strides = array<i32>} : memref<144x256xbf16, #tpu.memory_space<vmem>>, vector<16x256xbf16>,
    %c255_i32_96 = arith.constant 255 : i32
    %190 = tpu.dynamic_rotate %167 by %c255_i32_96 dim 1 : vector<16x256xf32>, i32 -> vector<16x256xf32>
    %191 = vector.broadcast %5 : vector<1x256xf32> to vector<16x256xf32>
    %192 = arith.mulf %190, %191 : vector<16x256xf32>
    %193 = arith.truncf %192 : vector<16x256xf32> to vector<16x256xbf16>
    %c80_97 = arith.constant 80 : index
    %c0_98 = arith.constant 0 : index
    %194 = vector.load %arg13[%c80_97, %c0_98] : memref<144x256xbf16, #tpu.memory_space<vmem>>, vector<16x256xbf16>
    tpu.vector_store %arg13[%c80_97, %c0_98], %193 {strides = array<i32>} : memref<144x256xbf16, #tpu.memory_space<vmem>>, vector<16x256xbf16>,
    %c241_i32_99 = arith.constant 241 : i32
    %195 = tpu.dynamic_rotate %167 by %c241_i32_99 dim 1 : vector<16x256xf32>, i32 -> vector<16x256xf32>
    %196 = vector.broadcast %6 : vector<1x256xf32> to vector<16x256xf32>
    %197 = arith.mulf %195, %196 : vector<16x256xf32>
    %198 = arith.truncf %197 : vector<16x256xf32> to vector<16x256xbf16>
    %c96_100 = arith.constant 96 : index
    %c0_101 = arith.constant 0 : index
    %199 = vector.load %arg13[%c96_100, %c0_101] : memref<144x256xbf16, #tpu.memory_space<vmem>>, vector<16x256xbf16>
    tpu.vector_store %arg13[%c96_100, %c0_101], %198 {strides = array<i32>} : memref<144x256xbf16, #tpu.memory_space<vmem>>, vector<16x256xbf16>,
    %c240_i32_102 = arith.constant 240 : i32
    %200 = tpu.dynamic_rotate %167 by %c240_i32_102 dim 1 : vector<16x256xf32>, i32 -> vector<16x256xf32>
    %201 = vector.broadcast %7 : vector<1x256xf32> to vector<16x256xf32>
    %202 = arith.mulf %200, %201 : vector<16x256xf32>
    %203 = arith.truncf %202 : vector<16x256xf32> to vector<16x256xbf16>
    %c112_103 = arith.constant 112 : index
    %c0_104 = arith.constant 0 : index
    %204 = vector.load %arg13[%c112_103, %c0_104] : memref<144x256xbf16, #tpu.memory_space<vmem>>, vector<16x256xbf16>
    tpu.vector_store %arg13[%c112_103, %c0_104], %203 {strides = array<i32>} : memref<144x256xbf16, #tpu.memory_space<vmem>>, vector<16x256xbf16>,
    %c239_i32_105 = arith.constant 239 : i32
    %205 = tpu.dynamic_rotate %167 by %c239_i32_105 dim 1 : vector<16x256xf32>, i32 -> vector<16x256xf32>
    %206 = vector.broadcast %8 : vector<1x256xf32> to vector<16x256xf32>
    %207 = arith.mulf %205, %206 : vector<16x256xf32>
    %208 = arith.truncf %207 : vector<16x256xf32> to vector<16x256xbf16>
    %c128_106 = arith.constant 128 : index
    %c0_107 = arith.constant 0 : index
    %209 = vector.load %arg13[%c128_106, %c0_107] : memref<144x256xbf16, #tpu.memory_space<vmem>>, vector<16x256xbf16>
    tpu.vector_store %arg13[%c128_106, %c0_107], %208 {strides = array<i32>} : memref<144x256xbf16, #tpu.memory_space<vmem>>, vector<16x256xbf16>,
    %c0_108 = arith.constant 0 : index
    %c0_109 = arith.constant 0 : index
    %210 = vector.load %arg13[%c0_108, %c0_109] : memref<144x256xbf16, #tpu.memory_space<vmem>>, vector<144x256xbf16>
    %c0_110 = arith.constant 0 : index
    %c0_111 = arith.constant 0 : index
    %211 = vector.load %arg9[%c0_110, %c0_111] : memref<8x144xbf16, #tpu.memory_space<vmem>>, vector<8x144xbf16>
    %cst_112 = arith.constant dense<0.000000e+00> : vector<8x256xf32>
    %212 = tpu.matmul %211, %210, %cst_112 {dimension_numbers = #tpu.dot_dimension_numbers<[1], [0], [0], [1], [0, 0, 1, 1], [], []>} : vector<8x144xbf16>, vector<144x256xbf16>, vector<8x256xf32> -> vector<8x256xf32>
    %c0_113 = arith.constant 0 : index
    %c0_114 = arith.constant 0 : index
    %213 = vector.load %arg10[%c0_113, %c0_114] : memref<8x1xf32, #tpu.memory_space<vmem>>, vector<8x1xf32>
    %214 = vector.broadcast %213 : vector<8x1xf32> to vector<8x256xf32>
    %215 = arith.addf %212, %214 : vector<8x256xf32>
    %cst_115 = arith.constant 0.000000e+00 : f32
    %216 = vector.broadcast %cst_115 : f32 to vector<8x256xf32>
    %217 = arith.maximumf %215, %216 : vector<8x256xf32>
    %c17_i32_116 = arith.constant 17 : i32
    %218 = tpu.dynamic_rotate %217 by %c17_i32_116 dim 1 : vector<8x256xf32>, i32 -> vector<8x256xf32>
    %219 = vector.broadcast %1 : vector<1x256xf32> to vector<8x256xf32>
    %220 = arith.mulf %218, %219 : vector<8x256xf32>
    %221 = arith.truncf %220 : vector<8x256xf32> to vector<8x256xbf16>
    %c0_117 = arith.constant 0 : index
    %c0_118 = arith.constant 0 : index
    %222 = vector.load %arg13[%c0_117, %c0_118] : memref<144x256xbf16, #tpu.memory_space<vmem>>, vector<8x256xbf16>
    tpu.vector_store %arg13[%c0_117, %c0_118], %221 {strides = array<i32>} : memref<144x256xbf16, #tpu.memory_space<vmem>>, vector<8x256xbf16>,
    %c16_i32_119 = arith.constant 16 : i32
    %223 = tpu.dynamic_rotate %217 by %c16_i32_119 dim 1 : vector<8x256xf32>, i32 -> vector<8x256xf32>
    %224 = vector.broadcast %2 : vector<1x256xf32> to vector<8x256xf32>
    %225 = arith.mulf %223, %224 : vector<8x256xf32>
    %226 = arith.truncf %225 : vector<8x256xf32> to vector<8x256xbf16>
    %c8_120 = arith.constant 8 : index
    %c0_121 = arith.constant 0 : index
    %227 = vector.load %arg13[%c8_120, %c0_121] : memref<144x256xbf16, #tpu.memory_space<vmem>>, vector<8x256xbf16>
    tpu.vector_store %arg13[%c8_120, %c0_121], %226 {strides = array<i32>} : memref<144x256xbf16, #tpu.memory_space<vmem>>, vector<8x256xbf16>,
    %c15_i32_122 = arith.constant 15 : i32
    %228 = tpu.dynamic_rotate %217 by %c15_i32_122 dim 1 : vector<8x256xf32>, i32 -> vector<8x256xf32>
    %229 = vector.broadcast %3 : vector<1x256xf32> to vector<8x256xf32>
    %230 = arith.mulf %228, %229 : vector<8x256xf32>
    %231 = arith.truncf %230 : vector<8x256xf32> to vector<8x256xbf16>
    %c16_123 = arith.constant 16 : index
    %c0_124 = arith.constant 0 : index
    %232 = vector.load %arg13[%c16_123, %c0_124] : memref<144x256xbf16, #tpu.memory_space<vmem>>, vector<8x256xbf16>
    tpu.vector_store %arg13[%c16_123, %c0_124], %231 {strides = array<i32>} : memref<144x256xbf16, #tpu.memory_space<vmem>>, vector<8x256xbf16>,
    %c1_i32_125 = arith.constant 1 : i32
    %233 = tpu.dynamic_rotate %217 by %c1_i32_125 dim 1 : vector<8x256xf32>, i32 -> vector<8x256xf32>
    %234 = vector.broadcast %4 : vector<1x256xf32> to vector<8x256xf32>
    %235 = arith.mulf %233, %234 : vector<8x256xf32>
    %236 = arith.truncf %235 : vector<8x256xf32> to vector<8x256xbf16>
    %c24_126 = arith.constant 24 : index
    %c0_127 = arith.constant 0 : index
    %237 = vector.load %arg13[%c24_126, %c0_127] : memref<144x256xbf16, #tpu.memory_space<vmem>>, vector<8x256xbf16>
    tpu.vector_store %arg13[%c24_126, %c0_127], %236 {strides = array<i32>} : memref<144x256xbf16, #tpu.memory_space<vmem>>, vector<8x256xbf16>,
    %238 = arith.truncf %217 : vector<8x256xf32> to vector<8x256xbf16>
    %c32_128 = arith.constant 32 : index
    %c0_129 = arith.constant 0 : index
    %239 = vector.load %arg13[%c32_128, %c0_129] : memref<144x256xbf16, #tpu.memory_space<vmem>>, vector<8x256xbf16>
    tpu.vector_store %arg13[%c32_128, %c0_129], %238 {strides = array<i32>} : memref<144x256xbf16, #tpu.memory_space<vmem>>, vector<8x256xbf16>,
    %c255_i32_130 = arith.constant 255 : i32
    %240 = tpu.dynamic_rotate %217 by %c255_i32_130 dim 1 : vector<8x256xf32>, i32 -> vector<8x256xf32>
    %241 = vector.broadcast %5 : vector<1x256xf32> to vector<8x256xf32>
    %242 = arith.mulf %240, %241 : vector<8x256xf32>
    %243 = arith.truncf %242 : vector<8x256xf32> to vector<8x256xbf16>
    %c40_131 = arith.constant 40 : index
    %c0_132 = arith.constant 0 : index
    %244 = vector.load %arg13[%c40_131, %c0_132] : memref<144x256xbf16, #tpu.memory_space<vmem>>, vector<8x256xbf16>
    tpu.vector_store %arg13[%c40_131, %c0_132], %243 {strides = array<i32>} : memref<144x256xbf16, #tpu.memory_space<vmem>>, vector<8x256xbf16>,
    %c241_i32_133 = arith.constant 241 : i32
    %245 = tpu.dynamic_rotate %217 by %c241_i32_133 dim 1 : vector<8x256xf32>, i32 -> vector<8x256xf32>
    %246 = vector.broadcast %6 : vector<1x256xf32> to vector<8x256xf32>
    %247 = arith.mulf %245, %246 : vector<8x256xf32>
    %248 = arith.truncf %247 : vector<8x256xf32> to vector<8x256xbf16>
    %c48_134 = arith.constant 48 : index
    %c0_135 = arith.constant 0 : index
    %249 = vector.load %arg13[%c48_134, %c0_135] : memref<144x256xbf16, #tpu.memory_space<vmem>>, vector<8x256xbf16>
    tpu.vector_store %arg13[%c48_134, %c0_135], %248 {strides = array<i32>} : memref<144x256xbf16, #tpu.memory_space<vmem>>, vector<8x256xbf16>,
    %c240_i32_136 = arith.constant 240 : i32
    %250 = tpu.dynamic_rotate %217 by %c240_i32_136 dim 1 : vector<8x256xf32>, i32 -> vector<8x256xf32>
    %251 = vector.broadcast %7 : vector<1x256xf32> to vector<8x256xf32>
    %252 = arith.mulf %250, %251 : vector<8x256xf32>
    %253 = arith.truncf %252 : vector<8x256xf32> to vector<8x256xbf16>
    %c56_137 = arith.constant 56 : index
    %c0_138 = arith.constant 0 : index
    %254 = vector.load %arg13[%c56_137, %c0_138] : memref<144x256xbf16, #tpu.memory_space<vmem>>, vector<8x256xbf16>
    tpu.vector_store %arg13[%c56_137, %c0_138], %253 {strides = array<i32>} : memref<144x256xbf16, #tpu.memory_space<vmem>>, vector<8x256xbf16>,
    %c239_i32_139 = arith.constant 239 : i32
    %255 = tpu.dynamic_rotate %217 by %c239_i32_139 dim 1 : vector<8x256xf32>, i32 -> vector<8x256xf32>
    %256 = vector.broadcast %8 : vector<1x256xf32> to vector<8x256xf32>
    %257 = arith.mulf %255, %256 : vector<8x256xf32>
    %258 = arith.truncf %257 : vector<8x256xf32> to vector<8x256xbf16>
    %c64_140 = arith.constant 64 : index
    %c0_141 = arith.constant 0 : index
    %259 = vector.load %arg13[%c64_140, %c0_141] : memref<144x256xbf16, #tpu.memory_space<vmem>>, vector<8x256xbf16>
    tpu.vector_store %arg13[%c64_140, %c0_141], %258 {strides = array<i32>} : memref<144x256xbf16, #tpu.memory_space<vmem>>, vector<8x256xbf16>,
    %c0_142 = arith.constant 0 : index
    %c0_143 = arith.constant 0 : index
    %260 = vector.load %arg13[%c0_142, %c0_143] : memref<144x256xbf16, #tpu.memory_space<vmem>>, vector<72x256xbf16>
    %c0_144 = arith.constant 0 : index
    %c0_145 = arith.constant 0 : index
    %261 = vector.load %arg11[%c0_144, %c0_145] : memref<4x72xbf16, #tpu.memory_space<vmem>>, vector<4x72xbf16>
    %cst_146 = arith.constant dense<0.000000e+00> : vector<4x256xf32>
    %262 = tpu.matmul %261, %260, %cst_146 {dimension_numbers = #tpu.dot_dimension_numbers<[1], [0], [0], [1], [0, 0, 1, 1], [], []>} : vector<4x72xbf16>, vector<72x256xbf16>, vector<4x256xf32> -> vector<4x256xf32>
    %cst_147 = arith.constant dense<0xFF800000> : vector<256xf32>
    %263 = vector.multi_reduction <maximumf>, %262, %cst_147 [0] : vector<4x256xf32> to vector<256xf32>
    %264 = vector.shape_cast %263 : vector<256xf32> to vector<1x256xf32>
    %265 = vector.broadcast %264 : vector<1x256xf32> to vector<4x256xf32>
    %266 = arith.subf %262, %265 : vector<4x256xf32>
    %267 = math.exp %266 : vector<4x256xf32>
    %cst_148 = arith.constant dense<0.000000e+00> : vector<256xf32>
    %268 = vector.multi_reduction <add>, %267, %cst_148 [0] : vector<4x256xf32> to vector<256xf32>
    %269 = vector.shape_cast %268 : vector<256xf32> to vector<1x256xf32>
    %270 = tpu.reciprocal %269 {approx = true} : vector<1x256xf32> -> vector<1x256xf32>
    %271 = vector.broadcast %270 : vector<1x256xf32> to vector<4x256xf32>
    %272 = arith.mulf %267, %271 : vector<4x256xf32>
    %c0_149 = arith.constant 0 : index
    %c0_150 = arith.constant 0 : index
    %273 = vector.load %arg12[%c0_149, %c0_150] : memref<4x256xf32, #tpu.memory_space<vmem>>, vector<4x256xf32>
    tpu.vector_store %arg12[%c0_149, %c0_150], %272 {strides = array<i32>} : memref<4x256xf32, #tpu.memory_space<vmem>>, vector<4x256xf32>,
    return
  }
  func.func @transform_0(%arg0: i32) -> (i32, i32, i32) {
    %c0_i32 = arith.constant 0 : i32
    %c0_i32_0 = arith.constant 0 : i32
    %c0_i32_1 = arith.constant 0 : i32
    return %arg0, %c0_i32, %c0_i32_0 : i32, i32, i32
  }
  func.func @transform_1(%arg0: i32) -> (i32, i32) {
    %c0_i32 = arith.constant 0 : i32
    %c0_i32_0 = arith.constant 0 : i32
    %c0_i32_1 = arith.constant 0 : i32
    return %c0_i32, %c0_i32_0 : i32, i32
  }
  func.func @transform_2(%arg0: i32) -> (i32, i32) {
    %c0_i32 = arith.constant 0 : i32
    %c0_i32_0 = arith.constant 0 : i32
    %c0_i32_1 = arith.constant 0 : i32
    return %c0_i32, %c0_i32_0 : i32, i32
  }
  func.func @transform_3(%arg0: i32) -> (i32, i32) {
    %c0_i32 = arith.constant 0 : i32
    %c0_i32_0 = arith.constant 0 : i32
    %c0_i32_1 = arith.constant 0 : i32
    return %c0_i32, %c0_i32_0 : i32, i32
  }
  func.func @transform_4(%arg0: i32) -> (i32, i32) {
    %c0_i32 = arith.constant 0 : i32
    %c0_i32_0 = arith.constant 0 : i32
    %c0_i32_1 = arith.constant 0 : i32
    return %c0_i32, %c0_i32_0 : i32, i32
  }
  func.func @transform_5(%arg0: i32) -> (i32, i32) {
    %c0_i32 = arith.constant 0 : i32
    %c0_i32_0 = arith.constant 0 : i32
    %c0_i32_1 = arith.constant 0 : i32
    return %c0_i32, %c0_i32_0 : i32, i32
  }
  func.func @transform_6(%arg0: i32) -> (i32, i32) {
    %c0_i32 = arith.constant 0 : i32
    %c0_i32_0 = arith.constant 0 : i32
    %c0_i32_1 = arith.constant 0 : i32
    return %c0_i32, %c0_i32_0 : i32, i32
  }
  func.func @transform_7(%arg0: i32) -> (i32, i32) {
    %c0_i32 = arith.constant 0 : i32
    %c0_i32_0 = arith.constant 0 : i32
    %c0_i32_1 = arith.constant 0 : i32
    return %c0_i32, %c0_i32_0 : i32, i32
  }
  func.func @transform_8(%arg0: i32) -> (i32, i32) {
    %c0_i32 = arith.constant 0 : i32
    %c0_i32_0 = arith.constant 0 : i32
    %c0_i32_1 = arith.constant 0 : i32
    return %c0_i32, %c0_i32_0 : i32, i32
  }
  func.func @transform_9(%arg0: i32) -> (i32, i32) {
    %c0_i32 = arith.constant 0 : i32
    %c0_i32_0 = arith.constant 0 : i32
    %c0_i32_1 = arith.constant 0 : i32
    return %c0_i32, %c0_i32_0 : i32, i32
  }
  func.func @transform_10(%arg0: i32) -> (i32, i32) {
    %c0_i32 = arith.constant 0 : i32
    %c0_i32_0 = arith.constant 0 : i32
    %c0_i32_1 = arith.constant 0 : i32
    return %c0_i32, %c0_i32_0 : i32, i32
  }
  func.func @transform_11(%arg0: i32) -> (i32, i32) {
    %c0_i32 = arith.constant 0 : i32
    %c0_i32_0 = arith.constant 0 : i32
    return %c0_i32, %arg0 : i32, i32
  }
}

</mosaic_0001>

<llo_original>
// kernel: squeeze.7
$region0: #{squeeze.7}
  %s0 = inlined_call_operand.vmem [shape: f32[512], index: 0, kind: input, shape index: {}]
  %s1 = inlined_call_operand.hbm [shape: f32[2,1,16,16], index: 1, kind: output, shape index: {}]
  $region1: #{squeeze.7} parent=0
    #allocation0 [shape = 'u8[16384]{0}', space=vmem, size = 0x4000, scoped, tag = 'operand span for operand 1']
    #allocation1 [shape = 's32[1]{0}', space=sflag, size = 0x4, scoped, tag = 'scoped memory for squeeze.7']
    #allocation2 [shape = 'u8[4096]{0}', space=vmem, size = 0x1000, scoped, tag = 'scoped mem for input reshape']
    %2 = vsyncpa [#allocation1], 0
    %s4 = ssub.s32 16, 1
    %v5 = vld [vmem:[%s0] sm:%s4]
    %6 = vst [vmem:[#allocation2] sm:%s4] %v5
    %v7 = vld [vmem:[#allocation2] sm:$0xf]
    %vm8 = vcmask 130048
    %9 = vst.msk [vmem:[#allocation0] ss:$8 sm:$0xf] %vm8, %v7
    %v10 = vld [vmem:[#allocation2] sm:$0xf]
    %11 = vrot.lane.b32.xlu0 %v10, 112
    %v12 = vpop.permute.xlu0 %11
    %vm13 = vcmask 130048
    %s14 = scalar_lea.vmem [#allocation0], 1
    %15 = vst.msk [vmem:[%s14] ss:$8 sm:$0xf] %vm13, %v12
    %v16 = vld [vmem:[#allocation2] sm:$0xf]
    %17 = vrot.lane.b32.xlu0 %v16, 96
    %v18 = vpop.permute.xlu0 %17
    %vm19 = vcmask 130048
    %s20 = scalar_lea.vmem [#allocation0], 2
    %21 = vst.msk [vmem:[%s20] ss:$8 sm:$0xf] %vm19, %v18
    %v22 = vld [vmem:[#allocation2] sm:$0xf]
    %23 = vrot.lane.b32.xlu0 %v22, 80
    %v24 = vpop.permute.xlu0 %23
    %vm25 = vcmask 130048
    %s26 = scalar_lea.vmem [#allocation0], 3
    %27 = vst.msk [vmem:[%s26] ss:$8 sm:$0xf] %vm25, %v24
    %v28 = vld [vmem:[#allocation2] sm:$0xf]
    %29 = vrot.lane.b32.xlu0 %v28, 64
    %v30 = vpop.permute.xlu0 %29
    %vm31 = vcmask 130048
    %s32 = scalar_lea.vmem [#allocation0], 4
    %33 = vst.msk [vmem:[%s32] ss:$8 sm:$0xf] %vm31, %v30
    %v34 = vld [vmem:[#allocation2] sm:$0xf]
    %35 = vrot.lane.b32.xlu0 %v34, 48
    %v36 = vpop.permute.xlu0 %35
    %vm37 = vcmask 130048
    %s38 = scalar_lea.vmem [#allocation0], 5
    %39 = vst.msk [vmem:[%s38] ss:$8 sm:$0xf] %vm37, %v36
    %v40 = vld [vmem:[#allocation2] sm:$0xf]
    %41 = vrot.lane.b32.xlu0 %v40, 32
    %v42 = vpop.permute.xlu0 %41
    %vm43 = vcmask 130048
    %s44 = scalar_lea.vmem [#allocation0], 6
    %45 = vst.msk [vmem:[%s44] ss:$8 sm:$0xf] %vm43, %v42
    %v46 = vld [vmem:[#allocation2] sm:$0xf]
    %47 = vrot.lane.b32.xlu0 %v46, 16
    %v48 = vpop.permute.xlu0 %47
    %vm49 = vcmask 130048
    %s50 = scalar_lea.vmem [#allocation0], 7
    %51 = vst.msk [vmem:[%s50] ss:$8 sm:$0xf] %vm49, %v48
    %53 = vsyncadd [#allocation1], 0
    %s55 = sshll.u32 [#allocation0], 4
    %s56 = int_to_ptr.vmem [resolvable:$true] %s55
    %s57 = sshll.u32 %s1, 4
    %s58 = int_to_ptr.hbm [resolvable:$true] %s57
    %60 = dma.vmem_to_hbm [thread:$0]  %s56, 512, %s58, [#allocation1]
    %62 = dma.done [#allocation1], 512
    %63 = vsyncpa [#allocation1], 1

// kernel: _fsfb_sp_call.1
$region0: #{_fsfb_sp_call.1}
  #allocation0 [shape = 'u32[]', space=smem, size = 0x4, offset = 0x4, fixed_abs, tag = 'smem constant byte address 0x4 - core index']
  #allocation1 [shape = 'u32[72,128]{1,0:T(1,128)}', space=vmem, size = 0x9000, scoped, tag = 'internal scratch']
  #allocation2 [shape = 'bf16[144,256]{1,0:T(8,128)(2,1)}', space=vmem, size = 0x12000, scoped, tag = 'scratch operand']
  %s0 = inlined_call_operand.vmem [shape: f32[2,4,256], index: 0, kind: input, shape index: {}]
  %s1 = inlined_call_operand.vmem [shape: f32[9,256], index: 1, kind: input, shape index: {}]
  %s2 = inlined_call_operand.vmem [shape: bf16[8,18], index: 2, kind: input, shape index: {}]
  %s3 = inlined_call_operand.vmem [shape: f32[8,1], index: 3, kind: input, shape index: {}]
  %s4 = inlined_call_operand.vmem [shape: bf16[16,72], index: 4, kind: input, shape index: {}]
  %s5 = inlined_call_operand.vmem [shape: f32[16,1], index: 5, kind: input, shape index: {}]
  %s6 = inlined_call_operand.vmem [shape: bf16[16,144], index: 6, kind: input, shape index: {}]
  %s7 = inlined_call_operand.vmem [shape: f32[16,1], index: 7, kind: input, shape index: {}]
  %s8 = inlined_call_operand.vmem [shape: bf16[8,144], index: 8, kind: input, shape index: {}]
  %s9 = inlined_call_operand.vmem [shape: f32[8,1], index: 9, kind: input, shape index: {}]
  %s10 = inlined_call_operand.vmem [shape: bf16[4,72], index: 10, kind: input, shape index: {}]
  %s11 = inlined_call_operand.vmem [shape: f32[4,512], index: 11, kind: output, shape index: {}]
  %s12 = sld [smem:[#allocation0]]
  $region77: #{_fsfb_sp_call.1} parent=0
    _
  %s14 = ssub.s32 1, %s12
  %s15 = scalar_select 0, %s14, %s12
  loop: start=0, step=1, limit=4
  $region2: #{_fsfb_sp_call.1} parent=0 // loop_pre_header
    _
  $region3: #{_fsfb_sp_call.1} parent=0 // loop_header
    %s17 = sphi 0, %s21
    %p18 = scmp.ge.s32.totalorder %s17, 4
    %s27 = sphi 0, %s29
    %s30 = sphi 0, %s27
    %s31 = sphi 0, %s30
    %s47 = sphi 0, %s31
    %s51 = sphi 0, %s51
    %s53 = sphi 0, %s51
    %s54 = sphi 0, %s53
    %s68 = sphi 0, %s54
    %s72 = sphi 0, %s72
    %s74 = sphi 0, %s72
    %s75 = sphi 0, %s74
    %s89 = sphi 0, %s75
    %s93 = sphi 0, %s93
    %s95 = sphi 0, %s93
    %s96 = sphi 0, %s95
    %s110 = sphi 0, %s96
    %s114 = sphi 0, %s114
    %s116 = sphi 0, %s114
    %s117 = sphi 0, %s116
    %s131 = sphi 0, %s117
    %s135 = sphi 0, %s135
    %s137 = sphi 0, %s135
    %s138 = sphi 0, %s137
    %s152 = sphi 0, %s138
    %s156 = sphi 0, %s156
    %s158 = sphi 0, %s156
    %s159 = sphi 0, %s158
    %s173 = sphi 0, %s159
    %s177 = sphi 0, %s177
    %s179 = sphi 0, %s177
    %s180 = sphi 0, %s179
    %s194 = sphi 0, %s180
    %s198 = sphi 0, %s198
    %s200 = sphi 0, %s198
    %s201 = sphi 0, %s200
    %s215 = sphi 0, %s201
    %s219 = sphi 0, %s219
    %s221 = sphi 0, %s219
    %s222 = sphi 0, %s221
    %s236 = sphi 0, %s222
    %s240 = sphi 0, %s240
    %s242 = sphi 0, %s240
    %s243 = sphi 0, %s242
    %s257 = sphi 0, %s243
    %s263 = sphi 0, %s265
    %s266 = sphi 0, %s263
    %s267 = sphi 0, %s266
    %s283 = sphi 0, %s267
  $region4: #{_fsfb_sp_call.1} parent=0 // loop_header_branch
    %20 = sbr.rel (%p18) target = $region8
  $region5: #{_fsfb_sp_call.1} parent=0 // loop_body
    %s22 = ssub.s32 %s17, 1
    %s23 = ssub.s32 %s17, 2
    %s24 = sadd.s32 %s17, 1
    %s25 = ssub.s32 %s17, %s24
    %p26 = scmp.eq.s32.totalorder %s25, 0
    %s28 = sadd.s32 %s27, 1
    %s29 = scalar_select %p26, %s27, %s28
    %p32 = pneg %p26
    %p33 = scmp.eq.s32.totalorder %s17, 1
    %p34 = por %p32, %p33
    %p35 = scmp.ne.s32.totalorder %s27, %s30
    %p36 = scmp.eq.s32.totalorder %s17, 0
    %p37 = por %p35, %p36
    %p38 = scmp.ne.s32.totalorder %s27, %s30
    %p39 = scmp.eq.s32.totalorder %s22, 1
    %p40 = por %p38, %p39
    %p41 = scmp.ne.s32.totalorder %s30, %s31
    %p42 = scmp.eq.s32.totalorder %s22, 0
    %p43 = por %p41, %p42
    %p44 = scmp.ne.s32.totalorder %s30, %s31
    %p45 = scmp.eq.s32.totalorder %s23, 1
    %p46 = por %p44, %p45
    %p48 = scmp.ne.s32.totalorder %s31, %s47
    %p49 = scmp.eq.s32.totalorder %s23, 0
    %p50 = por %p48, %p49
    %s52 = sadd.s32 %s51, 1
    %p55 = scmp.eq.s32.totalorder %s17, 1
    %p56 = scmp.ne.s32.totalorder %s51, %s53
    %p57 = scmp.eq.s32.totalorder %s17, 0
    %p58 = por %p56, %p57
    %p59 = scmp.ne.s32.totalorder %s51, %s53
    %p60 = scmp.eq.s32.totalorder %s22, 1
    %p61 = por %p59, %p60
    %p62 = scmp.ne.s32.totalorder %s53, %s54
    %p63 = scmp.eq.s32.totalorder %s22, 0
    %p64 = por %p62, %p63
    %p65 = scmp.ne.s32.totalorder %s53, %s54
    %p66 = scmp.eq.s32.totalorder %s23, 1
    %p67 = por %p65, %p66
    %p69 = scmp.ne.s32.totalorder %s54, %s68
    %p70 = scmp.eq.s32.totalorder %s23, 0
    %p71 = por %p69, %p70
    %s73 = sadd.s32 %s72, 1
    %p76 = scmp.eq.s32.totalorder %s17, 1
    %p77 = scmp.ne.s32.totalorder %s72, %s74
    %p78 = scmp.eq.s32.totalorder %s17, 0
    %p79 = por %p77, %p78
    %p80 = scmp.ne.s32.totalorder %s72, %s74
    %p81 = scmp.eq.s32.totalorder %s22, 1
    %p82 = por %p80, %p81
    %p83 = scmp.ne.s32.totalorder %s74, %s75
    %p84 = scmp.eq.s32.totalorder %s22, 0
    %p85 = por %p83, %p84
    %p86 = scmp.ne.s32.totalorder %s74, %s75
    %p87 = scmp.eq.s32.totalorder %s23, 1
    %p88 = por %p86, %p87
    %p90 = scmp.ne.s32.totalorder %s75, %s89
    %p91 = scmp.eq.s32.totalorder %s23, 0
    %p92 = por %p90, %p91
    %s94 = sadd.s32 %s93, 1
    %p97 = scmp.eq.s32.totalorder %s17, 1
    %p98 = scmp.ne.s32.totalorder %s93, %s95
    %p99 = scmp.eq.s32.totalorder %s17, 0
    %p100 = por %p98, %p99
    %p101 = scmp.ne.s32.totalorder %s93, %s95
    %p102 = scmp.eq.s32.totalorder %s22, 1
    %p103 = por %p101, %p102
    %p104 = scmp.ne.s32.totalorder %s95, %s96
    %p105 = scmp.eq.s32.totalorder %s22, 0
    %p106 = por %p104, %p105
    %p107 = scmp.ne.s32.totalorder %s95, %s96
    %p108 = scmp.eq.s32.totalorder %s23, 1
    %p109 = por %p107, %p108
    %p111 = scmp.ne.s32.totalorder %s96, %s110
    %p112 = scmp.eq.s32.totalorder %s23, 0
    %p113 = por %p111, %p112
    %s115 = sadd.s32 %s114, 1
    %p118 = scmp.eq.s32.totalorder %s17, 1
    %p119 = scmp.ne.s32.totalorder %s114, %s116
    %p120 = scmp.eq.s32.totalorder %s17, 0
    %p121 = por %p119, %p120
    %p122 = scmp.ne.s32.totalorder %s114, %s116
    %p123 = scmp.eq.s32.totalorder %s22, 1
    %p124 = por %p122, %p123
    %p125 = scmp.ne.s32.totalorder %s116, %s117
    %p126 = scmp.eq.s32.totalorder %s22, 0
    %p127 = por %p125, %p126
    %p128 = scmp.ne.s32.totalorder %s116, %s117
    %p129 = scmp.eq.s32.totalorder %s23, 1
    %p130 = por %p128, %p129
    %p132 = scmp.ne.s32.totalorder %s117, %s131
    %p133 = scmp.eq.s32.totalorder %s23, 0
    %p134 = por %p132, %p133
    %s136 = sadd.s32 %s135, 1
    %p139 = scmp.eq.s32.totalorder %s17, 1
    %p140 = scmp.ne.s32.totalorder %s135, %s137
    %p141 = scmp.eq.s32.totalorder %s17, 0
    %p142 = por %p140, %p141
    %p143 = scmp.ne.s32.totalorder %s135, %s137
    %p144 = scmp.eq.s32.totalorder %s22, 1
    %p145 = por %p143, %p144
    %p146 = scmp.ne.s32.totalorder %s137, %s138
    %p147 = scmp.eq.s32.totalorder %s22, 0
    %p148 = por %p146, %p147
    %p149 = scmp.ne.s32.totalorder %s137, %s138
    %p150 = scmp.eq.s32.totalorder %s23, 1
    %p151 = por %p149, %p150
    %p153 = scmp.ne.s32.totalorder %s138, %s152
    %p154 = scmp.eq.s32.totalorder %s23, 0
    %p155 = por %p153, %p154
    %s157 = sadd.s32 %s156, 1
    %p160 = scmp.eq.s32.totalorder %s17, 1
    %p161 = scmp.ne.s32.totalorder %s156, %s158
    %p162 = scmp.eq.s32.totalorder %s17, 0
    %p163 = por %p161, %p162
    %p164 = scmp.ne.s32.totalorder %s156, %s158
    %p165 = scmp.eq.s32.totalorder %s22, 1
    %p166 = por %p164, %p165
    %p167 = scmp.ne.s32.totalorder %s158, %s159
    %p168 = scmp.eq.s32.totalorder %s22, 0
    %p169 = por %p167, %p168
    %p170 = scmp.ne.s32.totalorder %s158, %s159
    %p171 = scmp.eq.s32.totalorder %s23, 1
    %p172 = por %p170, %p171
    %p174 = scmp.ne.s32.totalorder %s159, %s173
    %p175 = scmp.eq.s32.totalorder %s23, 0
    %p176 = por %p174, %p175
    %s178 = sadd.s32 %s177, 1
    %p181 = scmp.eq.s32.totalorder %s17, 1
    %p182 = scmp.ne.s32.totalorder %s177, %s179
    %p183 = scmp.eq.s32.totalorder %s17, 0
    %p184 = por %p182, %p183
    %p185 = scmp.ne.s32.totalorder %s177, %s179
    %p186 = scmp.eq.s32.totalorder %s22, 1
    %p187 = por %p185, %p186
    %p188 = scmp.ne.s32.totalorder %s179, %s180
    %p189 = scmp.eq.s32.totalorder %s22, 0
    %p190 = por %p188, %p189
    %p191 = scmp.ne.s32.totalorder %s179, %s180
    %p192 = scmp.eq.s32.totalorder %s23, 1
    %p193 = por %p191, %p192
    %p195 = scmp.ne.s32.totalorder %s180, %s194
    %p196 = scmp.eq.s32.totalorder %s23, 0
    %p197 = por %p195, %p196
    %s199 = sadd.s32 %s198, 1
    %p202 = scmp.eq.s32.totalorder %s17, 1
    %p203 = scmp.ne.s32.totalorder %s198, %s200
    %p204 = scmp.eq.s32.totalorder %s17, 0
    %p205 = por %p203, %p204
    %p206 = scmp.ne.s32.totalorder %s198, %s200
    %p207 = scmp.eq.s32.totalorder %s22, 1
    %p208 = por %p206, %p207
    %p209 = scmp.ne.s32.totalorder %s200, %s201
    %p210 = scmp.eq.s32.totalorder %s22, 0
    %p211 = por %p209, %p210
    %p212 = scmp.ne.s32.totalorder %s200, %s201
    %p213 = scmp.eq.s32.totalorder %s23, 1
    %p214 = por %p212, %p213
    %p216 = scmp.ne.s32.totalorder %s201, %s215
    %p217 = scmp.eq.s32.totalorder %s23, 0
    %p218 = por %p216, %p217
    %s220 = sadd.s32 %s219, 1
    %p223 = scmp.eq.s32.totalorder %s17, 1
    %p224 = scmp.ne.s32.totalorder %s219, %s221
    %p225 = scmp.eq.s32.totalorder %s17, 0
    %p226 = por %p224, %p225
    %p227 = scmp.ne.s32.totalorder %s219, %s221
    %p228 = scmp.eq.s32.totalorder %s22, 1
    %p229 = por %p227, %p228
    %p230 = scmp.ne.s32.totalorder %s221, %s222
    %p231 = scmp.eq.s32.totalorder %s22, 0
    %p232 = por %p230, %p231
    %p233 = scmp.ne.s32.totalorder %s221, %s222
    %p234 = scmp.eq.s32.totalorder %s23, 1
    %p235 = por %p233, %p234
    %p237 = scmp.ne.s32.totalorder %s222, %s236
    %p238 = scmp.eq.s32.totalorder %s23, 0
    %p239 = por %p237, %p238
    %s241 = sadd.s32 %s240, 1
    %p244 = scmp.eq.s32.totalorder %s17, 1
    %p245 = scmp.ne.s32.totalorder %s240, %s242
    %p246 = scmp.eq.s32.totalorder %s17, 0
    %p247 = por %p245, %p246
    %p248 = scmp.ne.s32.totalorder %s240, %s242
    %p249 = scmp.eq.s32.totalorder %s22, 1
    %p250 = por %p248, %p249
    %p251 = scmp.ne.s32.totalorder %s242, %s243
    %p252 = scmp.eq.s32.totalorder %s22, 0
    %p253 = por %p251, %p252
    %p254 = scmp.ne.s32.totalorder %s242, %s243
    %p255 = scmp.eq.s32.totalorder %s23, 1
    %p256 = por %p254, %p255
    %p258 = scmp.ne.s32.totalorder %s243, %s257
    %p259 = scmp.eq.s32.totalorder %s23, 0
    %p260 = por %p258, %p259
    %s261 = ssub.s32 %s17, %s24
    %p262 = scmp.eq.s32.totalorder %s261, 0
    %s264 = sadd.s32 %s263, 1
    %s265 = scalar_select %p262, %s263, %s264
    %p268 = pneg %p262
    %p269 = scmp.eq.s32.totalorder %s17, 1
    %p270 = por %p268, %p269
    %p271 = scmp.ne.s32.totalorder %s263, %s266
    %p272 = scmp.eq.s32.totalorder %s17, 0
    %p273 = por %p271, %p272
    %p274 = scmp.ne.s32.totalorder %s263, %s266
    %p275 = scmp.eq.s32.totalorder %s22, 1
    %p276 = por %p274, %p275
    %p277 = scmp.ne.s32.totalorder %s266, %s267
    %p278 = scmp.eq.s32.totalorder %s22, 0
    %p279 = por %p277, %p278
    %p280 = scmp.ne.s32.totalorder %s266, %s267
    %p281 = scmp.eq.s32.totalorder %s23, 1
    %p282 = por %p280, %p281
    %p284 = scmp.ne.s32.totalorder %s267, %s283
    %p285 = scmp.eq.s32.totalorder %s23, 0
    %p286 = por %p284, %p285
    %p287 = scmp.le.s32.totalorder 1, %s17
    %p288 = scmp.lt.s32.totalorder %s17, 3
    %p289 = pnand %p287, %p288
    %p290 = pneg %p289
    // Predicated region
    $region9: #{_fsfb_sp_call.1} parent=5 // pred_check
      _
    $region10: #{_fsfb_sp_call.1} parent=5 // pred_check_branch
      %292 = sbr.rel (%p289) target = $region12
    $region11: #{_fsfb_sp_call.1} parent=5 // pred_region
      %s293 = ssub.s32 %s17, 1
      // Predicated region
      $region13: #{_fsfb_sp_call.1} parent=11 // pred_check
        %p294 = pneg %p64
      $region14: #{_fsfb_sp_call.1} parent=11 // pred_check_branch
        %296 = sbr.rel (%p294) target = $region16
      $region15: #{_fsfb_sp_call.1} parent=11 // pred_region
        _
      $region16: #{_fsfb_sp_call.1} parent=11 // pred_fallthru
        _
      // Predicated region
      $region17: #{_fsfb_sp_call.1} parent=11 // pred_check
        %p297 = pneg %p85
      $region18: #{_fsfb_sp_call.1} parent=11 // pred_check_branch
        %299 = sbr.rel (%p297) target = $region20
      $region19: #{_fsfb_sp_call.1} parent=11 // pred_region
        _
      $region20: #{_fsfb_sp_call.1} parent=11 // pred_fallthru
        _
      // Predicated region
      $region21: #{_fsfb_sp_call.1} parent=11 // pred_check
        %p300 = pneg %p106
      $region22: #{_fsfb_sp_call.1} parent=11 // pred_check_branch
        %302 = sbr.rel (%p300) target = $region24
      $region23: #{_fsfb_sp_call.1} parent=11 // pred_region
        _
      $region24: #{_fsfb_sp_call.1} parent=11 // pred_fallthru
        _
      // Predicated region
      $region25: #{_fsfb_sp_call.1} parent=11 // pred_check
        %p303 = pneg %p127
      $region26: #{_fsfb_sp_call.1} parent=11 // pred_check_branch
        %305 = sbr.rel (%p303) target = $region28
      $region27: #{_fsfb_sp_call.1} parent=11 // pred_region
        _
      $region28: #{_fsfb_sp_call.1} parent=11 // pred_fallthru
        _
      // Predicated region
      $region29: #{_fsfb_sp_call.1} parent=11 // pred_check
        %p306 = pneg %p148
      $region30: #{_fsfb_sp_call.1} parent=11 // pred_check_branch
        %308 = sbr.rel (%p306) target = $region32
      $region31: #{_fsfb_sp_call.1} parent=11 // pred_region
        _
      $region32: #{_fsfb_sp_call.1} parent=11 // pred_fallthru
        _
      // Predicated region
      $region33: #{_fsfb_sp_call.1} parent=11 // pred_check
        %p309 = pneg %p169
      $region34: #{_fsfb_sp_call.1} parent=11 // pred_check_branch
        %311 = sbr.rel (%p309) target = $region36
      $region35: #{_fsfb_sp_call.1} parent=11 // pred_region
        _
      $region36: #{_fsfb_sp_call.1} parent=11 // pred_fallthru
        _
      // Predicated region
      $region37: #{_fsfb_sp_call.1} parent=11 // pred_check
        %p312 = pneg %p190
      $region38: #{_fsfb_sp_call.1} parent=11 // pred_check_branch
        %314 = sbr.rel (%p312) target = $region40
      $region39: #{_fsfb_sp_call.1} parent=11 // pred_region
        _
      $region40: #{_fsfb_sp_call.1} parent=11 // pred_fallthru
        _
      // Predicated region
      $region41: #{_fsfb_sp_call.1} parent=11 // pred_check
        %p315 = pneg %p211
      $region42: #{_fsfb_sp_call.1} parent=11 // pred_check_branch
        %317 = sbr.rel (%p315) target = $region44
      $region43: #{_fsfb_sp_call.1} parent=11 // pred_region
        _
      $region44: #{_fsfb_sp_call.1} parent=11 // pred_fallthru
        _
      // Predicated region
      $region45: #{_fsfb_sp_call.1} parent=11 // pred_check
        %p318 = pneg %p232
      $region46: #{_fsfb_sp_call.1} parent=11 // pred_check_branch
        %320 = sbr.rel (%p318) target = $region48
      $region47: #{_fsfb_sp_call.1} parent=11 // pred_region
        _
      $region48: #{_fsfb_sp_call.1} parent=11 // pred_fallthru
        _
      // Predicated region
      $region49: #{_fsfb_sp_call.1} parent=11 // pred_check
        %p321 = pneg %p253
      $region50: #{_fsfb_sp_call.1} parent=11 // pred_check_branch
        %323 = sbr.rel (%p321) target = $region52
      $region51: #{_fsfb_sp_call.1} parent=11 // pred_region
        _
      $region52: #{_fsfb_sp_call.1} parent=11 // pred_fallthru
        _
    $region12: #{_fsfb_sp_call.1} parent=5 // pred_fallthru
      _
    %p324 = scmp.lt.s32.totalorder %s17, 2
    // Predicated region
    $region53: #{_fsfb_sp_call.1} parent=5 // pred_check
      %p325 = pneg %p324
    $region54: #{_fsfb_sp_call.1} parent=5 // pred_check_branch
      %327 = sbr.rel (%p325) target = $region56
    $region55: #{_fsfb_sp_call.1} parent=5 // pred_region
      // Predicated region
      $region57: #{_fsfb_sp_call.1} parent=55 // pred_check
        %p328 = pneg %p37
      $region58: #{_fsfb_sp_call.1} parent=55 // pred_check_branch
        %330 = sbr.rel (%p328) target = $region60
      $region59: #{_fsfb_sp_call.1} parent=55 // pred_region
        %p331 = scmp.lt.s32.totalorder %s17, 1
        %s332 = scalar_select %p331, %s17, 1
        %s333 = smul.addr %s332, 2
        %s334 = smul.addr %s333, 4
        %s335 = scalar_lea.vmem %s0, %s334
      $region60: #{_fsfb_sp_call.1} parent=55 // pred_fallthru
        _
    $region56: #{_fsfb_sp_call.1} parent=5 // pred_fallthru
      _
    %p336 = scmp.le.s32.totalorder 1, %s17
    %p337 = scmp.lt.s32.totalorder %s17, 3
    %p338 = pnand %p336, %p337
    %p339 = pneg %p338
    // Predicated region
    $region61: #{_fsfb_sp_call.1} parent=5 // pred_check
      _
    $region62: #{_fsfb_sp_call.1} parent=5 // pred_check_branch
      %341 = sbr.rel (%p338) target = $region64
    $region63: #{_fsfb_sp_call.1} parent=5 // pred_region
      %s342 = ssub.s32 %s17, 1
      %p343 = scmp.lt.s32.totalorder %s22, 1
      %s344 = scalar_select %p343, %s22, 1
      %s345 = smul.addr %s344, 2
      %s346 = smul.addr %s345, 4
      %s347 = scalar_lea.vmem %s0, %s346
      %p348 = pneg %p43
      %p349 = pneg %p40
      %p350 = pneg %p64
      %p351 = pneg %p61
      %p352 = pneg %p85
      %p353 = pneg %p82
      %p354 = pneg %p106
      %p355 = pneg %p103
      %p356 = pneg %p127
      %p357 = pneg %p124
      %p358 = pneg %p148
      %p359 = pneg %p145
      %p360 = pneg %p169
      %p361 = pneg %p166
      %p362 = pneg %p190
      %p363 = pneg %p187
      %p364 = pneg %p211
      %p365 = pneg %p208
      %p366 = pneg %p232
      %p367 = pneg %p229
      %p368 = pneg %p253
      %p369 = pneg %p250
      %p370 = pneg %p279
      %p371 = pneg %p276
      %s372 = smul.u32 2, %s22
      %p373 = scmp.lt.s32.totalorder %s372, 3
      %s374 = scalar_select %p373, %s372, 3
      %s375 = smul.addr %s374, 4
      %s376 = scalar_lea.vmem %s11, %s375
      %p377 = scmp.lt.s32.totalorder %s22, 1
      %s378 = scalar_select %p377, %s22, 1
      %s379 = smul.addr %s378, 2
      %s380 = smul.addr %s379, 4
      %s381 = scalar_lea.vmem %s0, %s380
      %s382 = smul.u32 2, %s22
      %p383 = scmp.lt.s32.totalorder %s382, 3
      %s384 = scalar_select %p383, %s382, 3
      %s385 = smul.addr %s384, 4
      %s386 = scalar_lea.vmem %s11, %s385
      %s387 = smul.u32 2, %s22
      %v389 = vld [vmem:[%s1] sm:$0xff]
      %v390 = vld [vmem:[%s1 + $0x8] sm:$0xff]
      %v391 = vld [vmem:[%s1 + $0x10] sm:$0x1]
      %v392 = vld [vmem:[%s1 + $0x18] sm:$0x1]
      %v393 = vld [vmem:[%s381] sm:$0xff]
      %395 = vst [vmem:[#allocation1] ss:$2 sm:$0xff] %v393
      %v396 = vld.sshfl [vmem:[#allocation1] sm:$0xff pattern:$0x75316420]
      %v397 = vld.sshfl [vmem:[#allocation1 + $0x8] sm:$0xff pattern:$0x75316420]
      %vm400 = vcmask 1043456
      %v401 = vsel %vm400, %v396, 0.0
      %v402 = vrot.slane %v401, 4
      %v403 = vadd.f32 %v401, %v402
      %v404 = vrot.slane %v403, 2
      %v405 = vadd.f32 %v403, %v404
      %v406 = vrot.slane %v405, 1
      %v407 = vadd.f32 %v405, %v406
      %v408 = vsel %vm400, %v397, 0.0
      %v409 = vrot.slane %v408, 4
      %v410 = vadd.f32 %v408, %v409
      %v411 = vrot.slane %v410, 2
      %v412 = vadd.f32 %v410, %v411
      %v413 = vrot.slane %v412, 1
      %v414 = vadd.f32 %v412, %v413
      %v415 = vrcp.pop 4.0
      %v416 = vmul.f32 4.0, %v415
      %v417 = vsub.f32 1.0, %v416
      %v418 = vmul.f32 %v415, %v417
      %v419 = vadd.f32 %v415, %v418
      %vm420 = vweird.f32 %v415
      %v421 = vsel %vm420, %v415, %v419
      %v422 = vmul.f32 %v407, %v421
      %v423 = vmul.f32 %v414, %v421
      %424 = vst [vmem:[#allocation1] ss:$2 sm:$0xff] %v393
      %v425 = vld.sshfl [vmem:[#allocation1] sm:$0xff pattern:$0x75316420]
      %v426 = vld.sshfl [vmem:[#allocation1 + $0x8] sm:$0xff pattern:$0x75316420]
      %v429 = vsel %vm400, %v425, -inf
      %v430 = vrot.slane %v429, 4
      %v431 = vmax.f32 %v429, %v430
      %v432 = vrot.slane %v431, 2
      %v433 = vmax.f32 %v431, %v432
      %v434 = vrot.slane %v433, 1
      %v435 = vmax.f32 %v433, %v434
      %v436 = vsel %vm400, %v426, -inf
      %v437 = vrot.slane %v436, 4
      %v438 = vmax.f32 %v436, %v437
      %v439 = vrot.slane %v438, 2
      %v440 = vmax.f32 %v438, %v439
      %v441 = vrot.slane %v440, 1
      %v442 = vmax.f32 %v440, %v441
      %vm443 = vcmask 1040384
      %v444 = vsel %vm443, %v422, %v435
      %v445 = vsel %vm443, %v423, %v442
      %446 = vrot.lane.b32.xlu0 %v444, 17
      %v447 = vpop.permute.xlu0 %446
      %448 = vrot.lane.b32.xlu0 %v445, 17
      %v449 = vpop.permute.xlu0 %448
      %v450 = vlaneseq
      %v451 = vand.u32 %v450, 127
      %vm452 = vcmp.lt.s32.totalorder %v451, 17
      %v453 = vsel %vm452, %v447, %v449
      %v454 = vsel %vm452, %v449, %v447
      %v455 = vperm.slane %v389, 0
      %v456 = vperm.slane %v390, 0
      %v457 = vmul.f32 %v454, %v455
      %v458 = vmul.f32 %v453, %v456
      %v459 = vpack.c.bf16 %v458, %v457
      %460 = vst [vmem:[#allocation2] sm:$0x11] %v459
      %461 = vrot.lane.b32.xlu0 %v444, 16
      %v462 = vpop.permute.xlu0 %461
      %463 = vrot.lane.b32.xlu0 %v445, 16
      %v464 = vpop.permute.xlu0 %463
      %vm465 = vcmp.lt.s32.totalorder %v451, 16
      %v466 = vsel %vm465, %v462, %v464
      %v467 = vsel %vm465, %v464, %v462
      %v468 = vperm.slane %v389, 1
      %v469 = vperm.slane %v390, 1
      %v470 = vmul.f32 %v467, %v468
      %v471 = vmul.f32 %v466, %v469
      %v472 = vpack.c.bf16 %v471, %v470
      %v474 = vrot.slane %v472, 7
      %476 = vst [vmem:[#allocation2] sm:$0x22] %v474
      %477 = vrot.lane.b32.xlu0 %v444, 15
      %v478 = vpop.permute.xlu0 %477
      %479 = vrot.lane.b32.xlu0 %v445, 15
      %v480 = vpop.permute.xlu0 %479
      %vm481 = vcmp.lt.s32.totalorder %v451, 15
      %v482 = vsel %vm481, %v478, %v480
      %v483 = vsel %vm481, %v480, %v478
      %v484 = vperm.slane %v389, 2
      %v485 = vperm.slane %v390, 2
      %v486 = vmul.f32 %v483, %v484
      %v487 = vmul.f32 %v482, %v485
      %v488 = vpack.c.bf16 %v487, %v486
      %v490 = vrot.slane %v488, 6
      %492 = vst [vmem:[#allocation2] sm:$0x44] %v490
      %493 = vrot.lane.b32.xlu0 %v444, 1
      %v494 = vpop.permute.xlu0 %493
      %495 = vrot.lane.b32.xlu0 %v445, 1
      %v496 = vpop.permute.xlu0 %495
      %vm497 = vcmp.lt.s32.totalorder %v451, 1
      %v498 = vsel %vm497, %v494, %v496
      %v499 = vsel %vm497, %v496, %v494
      %v500 = vperm.slane %v389, 3
      %v501 = vperm.slane %v390, 3
      %v502 = vmul.f32 %v499, %v500
      %v503 = vmul.f32 %v498, %v501
      %v504 = vpack.c.bf16 %v503, %v502
      %v506 = vrot.slane %v504, 5
      %508 = vst [vmem:[#allocation2] sm:$0x88] %v506
      %v509 = vpack.c.bf16 %v445, %v444
      %510 = vst [vmem:[#allocation2 + $0x8] sm:$0x11] %v509
      %511 = vrot.lane.b32.xlu0 %v444, 127
      %v512 = vpop.permute.xlu0 %511
      %513 = vrot.lane.b32.xlu0 %v445, 127
      %v514 = vpop.permute.xlu0 %513
      %vm515 = vcmp.lt.s32.totalorder %v451, 127
      %v516 = vsel %vm515, %v512, %v514
      %v517 = vsel %vm515, %v514, %v512
      %v518 = vperm.slane %v389, 5
      %v519 = vperm.slane %v390, 5
      %v520 = vmul.f32 %v516, %v518
      %v521 = vmul.f32 %v517, %v519
      %v522 = vpack.c.bf16 %v521, %v520
      %v524 = vrot.slane %v522, 7
      %526 = vst [vmem:[#allocation2 + $0x8] sm:$0x22] %v524
      %527 = vrot.lane.b32.xlu0 %v444, 113
      %v528 = vpop.permute.xlu0 %527
      %529 = vrot.lane.b32.xlu0 %v445, 113
      %v530 = vpop.permute.xlu0 %529
      %vm531 = vcmp.lt.s32.totalorder %v451, 113
      %v532 = vsel %vm531, %v528, %v530
      %v533 = vsel %vm531, %v530, %v528
      %v534 = vperm.slane %v389, 6
      %v535 = vperm.slane %v390, 6
      %v536 = vmul.f32 %v532, %v534
      %v537 = vmul.f32 %v533, %v535
      %v538 = vpack.c.bf16 %v537, %v536
      %v540 = vrot.slane %v538, 6
      %542 = vst [vmem:[#allocation2 + $0x8] sm:$0x44] %v540
      %543 = vrot.lane.b32.xlu0 %v444, 112
      %v544 = vpop.permute.xlu0 %543
      %545 = vrot.lane.b32.xlu0 %v445, 112
      %v546 = vpop.permute.xlu0 %545
      %vm547 = vcmp.lt.s32.totalorder %v451, 112
      %v548 = vsel %vm547, %v544, %v546
      %v549 = vsel %vm547, %v546, %v544
      %v550 = vperm.slane %v389, 7
      %v551 = vperm.slane %v390, 7
      %v552 = vmul.f32 %v548, %v550
      %v553 = vmul.f32 %v549, %v551
      %v554 = vpack.c.bf16 %v553, %v552
      %v556 = vrot.slane %v554, 5
      %558 = vst [vmem:[#allocation2 + $0x8] sm:$0x88] %v556
      %559 = vrot.lane.b32.xlu0 %v444, 111
      %v560 = vpop.permute.xlu0 %559
      %561 = vrot.lane.b32.xlu0 %v445, 111
      %v562 = vpop.permute.xlu0 %561
      %vm563 = vcmp.lt.s32.totalorder %v451, 111
      %v564 = vsel %vm563, %v560, %v562
      %v565 = vsel %vm563, %v562, %v560
      %v566 = vperm.slane %v391, 0
      %v567 = vperm.slane %v392, 0
      %v568 = vmul.f32 %v564, %v566
      %v569 = vmul.f32 %v565, %v567
      %v570 = vpack.c.bf16 %v569, %v568
      %571 = vst [vmem:[#allocation2 + $0x10] sm:$0x11] %v570
      %v572 = vld [vmem:[#allocation2] sm:$0xff]
      %v573 = vld [vmem:[#allocation2 + $0x8] sm:$0xff]
      %v574 = vld [vmem:[#allocation2 + $0x10] sm:$0x11]
      %v575 = vld [vmem:[%s2] sm:$0xf]
      %v576 = vld [vmem:[%s3] sm:$0xff]
      %578 = vset.pattern.permute.xlu0 0
      %579 = vperm.xlu0 %578, %v576
      %v580 = vpop.permute.xlu0 %579
      %v585 = vunpack.c.l.b16 %v572
      %v586 = vunpack.c.h.b16 %v572
      %v587 = vunpack.c.l.b16 %v573
      %v588 = vunpack.c.h.b16 %v573
      %v589 = vunpack.c.l.b16 %v574
      %v590 = vunpack.c.h.b16 %v574
      %v591 = vpack.c.b16 %v587, %v585
      %v592 = vpack.c.b16 %v588, %v586
      %v593 = vpack.c.b16 %v589, %v589
      %v594 = vpack.c.b16 %v590, %v590
      %vm597 = vcmask 146432
      %v599 = vsel %vm597, %v575, 0
      %v602 = vsel %vm443, %v593, 0
      %v605 = vsel %vm443, %v594, 0
      %607 = vmatpush.bf16.msra.mxu0 0
      %608 = vmatpush.bf16.msra.mxu0 0
      %609 = vmatpush.bf16.msra.mxu0 0
      %610 = vmatpush.bf16.msra.mxu0 0
      %611 = vmatpush.bf16.msra.mxu0 0
      %612 = vmatpush.bf16.msra.mxu0 0
      %613 = vmatpush.bf16.msra.mxu0 %v602
      %614 = vmatpush.bf16.msra.mxu0 %v591
      %615 = vmatmul.bf16.gmra.mxu0 %v599
      %v616 = vpop.f32.mrf.mxu0
      %v617 = vadd.f32 %v580, %v616
      %v618 = vpop.f32.mrf.mxu0
      %619 = vdwg.mxu0
      %620 = vmatpush.bf16.msra.mxu0 0
      %621 = vmatpush.bf16.msra.mxu0 0
      %622 = vmatpush.bf16.msra.mxu0 0
      %623 = vmatpush.bf16.msra.mxu0 0
      %624 = vmatpush.bf16.msra.mxu0 0
      %625 = vmatpush.bf16.msra.mxu0 0
      %626 = vmatpush.bf16.msra.mxu0 %v605
      %627 = vmatpush.bf16.msra.mxu0 %v592
      %628 = vmatmul.bf16.gmra.mxu0 %v599
      %v629 = vpop.f32.mrf.mxu0
      %v630 = vadd.f32 %v580, %v629
      %v631 = vpop.f32.mrf.mxu0
      %632 = vdwg.mxu0
      %v633 = vmax.f32 %v617, 0.0
      %v634 = vmax.f32 %v630, 0.0
      %635 = vrot.lane.b32.xlu0 %v633, 17
      %v636 = vpop.permute.xlu0 %635
      %637 = vrot.lane.b32.xlu0 %v634, 17
      %v638 = vpop.permute.xlu0 %637
      %v639 = vsel %vm452, %v636, %v638
      %v640 = vsel %vm452, %v638, %v636
      %v641 = vmul.f32 %v640, %v455
      %v642 = vmul.f32 %v639, %v456
      %v643 = vpack.c.bf16 %v642, %v641
      %644 = vst [vmem:[#allocation2] sm:$0xff] %v643
      %645 = vrot.lane.b32.xlu0 %v633, 16
      %v646 = vpop.permute.xlu0 %645
      %647 = vrot.lane.b32.xlu0 %v634, 16
      %v648 = vpop.permute.xlu0 %647
      %v649 = vsel %vm465, %v646, %v648
      %v650 = vsel %vm465, %v648, %v646
      %v651 = vmul.f32 %v650, %v468
      %v652 = vmul.f32 %v649, %v469
      %v653 = vpack.c.bf16 %v652, %v651
      %654 = vst [vmem:[#allocation2 + $0x8] sm:$0xff] %v653
      %655 = vrot.lane.b32.xlu0 %v633, 15
      %v656 = vpop.permute.xlu0 %655
      %657 = vrot.lane.b32.xlu0 %v634, 15
      %v658 = vpop.permute.xlu0 %657
      %v659 = vsel %vm481, %v656, %v658
      %v660 = vsel %vm481, %v658, %v656
      %v661 = vmul.f32 %v660, %v484
      %v662 = vmul.f32 %v659, %v485
      %v663 = vpack.c.bf16 %v662, %v661
      %664 = vst [vmem:[#allocation2 + $0x10] sm:$0xff] %v663
      %665 = vrot.lane.b32.xlu0 %v633, 1
      %v666 = vpop.permute.xlu0 %665
      %667 = vrot.lane.b32.xlu0 %v634, 1
      %v668 = vpop.permute.xlu0 %667
      %v669 = vsel %vm497, %v666, %v668
      %v670 = vsel %vm497, %v668, %v666
      %v671 = vmul.f32 %v670, %v500
      %v672 = vmul.f32 %v669, %v501
      %v673 = vpack.c.bf16 %v672, %v671
      %674 = vst [vmem:[#allocation2 + $0x18] sm:$0xff] %v673
      %v675 = vpack.c.bf16 %v634, %v633
      %676 = vst [vmem:[#allocation2 + $0x20] sm:$0xff] %v675
      %677 = vrot.lane.b32.xlu0 %v633, 127
      %v678 = vpop.permute.xlu0 %677
      %679 = vrot.lane.b32.xlu0 %v634, 127
      %v680 = vpop.permute.xlu0 %679
      %v681 = vsel %vm515, %v678, %v680
      %v682 = vsel %vm515, %v680, %v678
      %v683 = vmul.f32 %v681, %v518
      %v684 = vmul.f32 %v682, %v519
      %v685 = vpack.c.bf16 %v684, %v683
      %686 = vst [vmem:[#allocation2 + $0x28] sm:$0xff] %v685
      %687 = vrot.lane.b32.xlu0 %v633, 113
      %v688 = vpop.permute.xlu0 %687
      %689 = vrot.lane.b32.xlu0 %v634, 113
      %v690 = vpop.permute.xlu0 %689
      %v691 = vsel %vm531, %v688, %v690
      %v692 = vsel %vm531, %v690, %v688
      %v693 = vmul.f32 %v691, %v534
      %v694 = vmul.f32 %v692, %v535
      %v695 = vpack.c.bf16 %v694, %v693
      %696 = vst [vmem:[#allocation2 + $0x30] sm:$0xff] %v695
      %697 = vrot.lane.b32.xlu0 %v633, 112
      %v698 = vpop.permute.xlu0 %697
      %699 = vrot.lane.b32.xlu0 %v634, 112
      %v700 = vpop.permute.xlu0 %699
      %v701 = vsel %vm547, %v698, %v700
      %v702 = vsel %vm547, %v700, %v698
      %v703 = vmul.f32 %v701, %v550
      %v704 = vmul.f32 %v702, %v551
      %v705 = vpack.c.bf16 %v704, %v703
      %706 = vst [vmem:[#allocation2 + $0x38] sm:$0xff] %v705
      %707 = vrot.lane.b32.xlu0 %v633, 111
      %v708 = vpop.permute.xlu0 %707
      %709 = vrot.lane.b32.xlu0 %v634, 111
      %v710 = vpop.permute.xlu0 %709
      %v711 = vsel %vm563, %v708, %v710
      %v712 = vsel %vm563, %v710, %v708
      %v713 = vmul.f32 %v711, %v566
      %v714 = vmul.f32 %v712, %v567
      %v715 = vpack.c.bf16 %v714, %v713
      %716 = vst [vmem:[#allocation2 + $0x40] sm:$0xff] %v715
      %v717 = vld [vmem:[#allocation2] sm:$0xff]
      %v718 = vld [vmem:[#allocation2 + $0x8] sm:$0xff]
      %v719 = vld [vmem:[#allocation2 + $0x10] sm:$0xff]
      %v720 = vld [vmem:[#allocation2 + $0x18] sm:$0xff]
      %v721 = vld [vmem:[#allocation2 + $0x20] sm:$0xff]
      %v722 = vld [vmem:[#allocation2 + $0x28] sm:$0xff]
      %v723 = vld [vmem:[#allocation2 + $0x30] sm:$0xff]
      %v724 = vld [vmem:[#allocation2 + $0x38] sm:$0xff]
      %v725 = vld [vmem:[#allocation2 + $0x40] sm:$0xff]
      %v726 = vld [vmem:[%s4] sm:$0xf]
      %v727 = vld [vmem:[%s4 + $0x4] sm:$0xf]
      %v728 = vld [vmem:[%s5] sm:$0xff]
      %v729 = vld [vmem:[%s5 + $0x8] sm:$0xff]
      %731 = vset.pattern.permute.xlu0 0
      %732 = vperm.xlu0 %731, %v728
      %v733 = vpop.permute.xlu0 %732
      %736 = vset.pattern.permute.xlu0 0
      %737 = vperm.xlu0 %736, %v729
      %v738 = vpop.permute.xlu0 %737
      %v742 = vunpack.c.l.b16 %v726
      %v743 = vunpack.c.l.b16 %v727
      %v744 = vpack.c.b16 %v743, %v742
      %v754 = vunpack.c.l.b16 %v717
      %v755 = vunpack.c.h.b16 %v717
      %v756 = vunpack.c.l.b16 %v718
      %v757 = vunpack.c.h.b16 %v718
      %v758 = vunpack.c.l.b16 %v719
      %v759 = vunpack.c.h.b16 %v719
      %v760 = vunpack.c.l.b16 %v720
      %v761 = vunpack.c.h.b16 %v720
      %v762 = vunpack.c.l.b16 %v721
      %v763 = vunpack.c.h.b16 %v721
      %v764 = vunpack.c.l.b16 %v722
      %v765 = vunpack.c.h.b16 %v722
      %v766 = vunpack.c.l.b16 %v723
      %v767 = vunpack.c.h.b16 %v723
      %v768 = vunpack.c.l.b16 %v724
      %v769 = vunpack.c.h.b16 %v724
      %v770 = vunpack.c.l.b16 %v725
      %v771 = vunpack.c.h.b16 %v725
      %v772 = vpack.c.b16 %v756, %v754
      %v773 = vpack.c.b16 %v757, %v755
      %v774 = vpack.c.b16 %v760, %v758
      %v775 = vpack.c.b16 %v761, %v759
      %v776 = vpack.c.b16 %v764, %v762
      %v777 = vpack.c.b16 %v765, %v763
      %v778 = vpack.c.b16 %v768, %v766
      %v779 = vpack.c.b16 %v769, %v767
      %v780 = vpack.c.b16 %v770, %v770
      %v781 = vpack.c.b16 %v771, %v771
      %vm790 = vcmask 588800
      %v792 = vsel %vm790, %v744, 0
      %v795 = vsel %vm400, %v780, 0
      %v798 = vsel %vm400, %v781, 0
      %800 = vmatpush.bf16.msra.mxu0 0
      %801 = vmatpush.bf16.msra.mxu0 0
      %802 = vmatpush.bf16.msra.mxu0 0
      %803 = vmatpush.bf16.msra.mxu0 %v795
      %804 = vmatpush.bf16.msra.mxu0 %v778
      %805 = vmatpush.bf16.msra.mxu0 %v776
      %806 = vmatpush.bf16.msra.mxu0 %v774
      %807 = vmatpush.bf16.msra.mxu0 %v772
      %808 = vmatmul.bf16.gmra.mxu0 %v792
      %v809 = vpop.f32.mrf.mxu0
      %v810 = vadd.f32 %v733, %v809
      %v811 = vpop.f32.mrf.mxu0
      %v812 = vadd.f32 %v738, %v811
      %813 = vdwg.mxu0
      %814 = vmatpush.bf16.msra.mxu0 0
      %815 = vmatpush.bf16.msra.mxu0 0
      %816 = vmatpush.bf16.msra.mxu0 0
      %817 = vmatpush.bf16.msra.mxu0 %v798
      %818 = vmatpush.bf16.msra.mxu0 %v779
      %819 = vmatpush.bf16.msra.mxu0 %v777
      %820 = vmatpush.bf16.msra.mxu0 %v775
      %821 = vmatpush.bf16.msra.mxu0 %v773
      %822 = vmatmul.bf16.gmra.mxu0 %v792
      %v823 = vpop.f32.mrf.mxu0
      %v824 = vadd.f32 %v733, %v823
      %v825 = vpop.f32.mrf.mxu0
      %v826 = vadd.f32 %v738, %v825
      %827 = vdwg.mxu0
      %v828 = vmax.f32 %v810, 0.0
      %v829 = vmax.f32 %v824, 0.0
      %v830 = vmax.f32 %v812, 0.0
      %v831 = vmax.f32 %v826, 0.0
      %832 = vrot.lane.b32.xlu0 %v828, 17
      %v833 = vpop.permute.xlu0 %832
      %834 = vrot.lane.b32.xlu0 %v830, 17
      %v835 = vpop.permute.xlu0 %834
      %836 = vrot.lane.b32.xlu0 %v829, 17
      %v837 = vpop.permute.xlu0 %836
      %838 = vrot.lane.b32.xlu0 %v831, 17
      %v839 = vpop.permute.xlu0 %838
      %v840 = vsel %vm452, %v833, %v837
      %v841 = vsel %vm452, %v835, %v839
      %v842 = vsel %vm452, %v837, %v833
      %v843 = vsel %vm452, %v839, %v835
      %v844 = vmul.f32 %v842, %v455
      %v845 = vmul.f32 %v840, %v456
      %v846 = vmul.f32 %v843, %v455
      %v847 = vmul.f32 %v841, %v456
      %v848 = vpack.c.bf16 %v845, %v844
      %v849 = vpack.c.bf16 %v847, %v846
      %850 = vst [vmem:[#allocation2] sm:$0xff] %v848
      %851 = vst [vmem:[#allocation2 + $0x8] sm:$0xff] %v849
      %852 = vrot.lane.b32.xlu0 %v828, 16
      %v853 = vpop.permute.xlu0 %852
      %854 = vrot.lane.b32.xlu0 %v830, 16
      %v855 = vpop.permute.xlu0 %854
      %856 = vrot.lane.b32.xlu0 %v829, 16
      %v857 = vpop.permute.xlu0 %856
      %858 = vrot.lane.b32.xlu0 %v831, 16
      %v859 = vpop.permute.xlu0 %858
      %v860 = vsel %vm465, %v853, %v857
      %v861 = vsel %vm465, %v855, %v859
      %v862 = vsel %vm465, %v857, %v853
      %v863 = vsel %vm465, %v859, %v855
      %v864 = vmul.f32 %v862, %v468
      %v865 = vmul.f32 %v860, %v469
      %v866 = vmul.f32 %v863, %v468
      %v867 = vmul.f32 %v861, %v469
      %v868 = vpack.c.bf16 %v865, %v864
      %v869 = vpack.c.bf16 %v867, %v866
      %870 = vst [vmem:[#allocation2 + $0x10] sm:$0xff] %v868
      %871 = vst [vmem:[#allocation2 + $0x18] sm:$0xff] %v869
      %872 = vrot.lane.b32.xlu0 %v828, 15
      %v873 = vpop.permute.xlu0 %872
      %874 = vrot.lane.b32.xlu0 %v830, 15
      %v875 = vpop.permute.xlu0 %874
      %876 = vrot.lane.b32.xlu0 %v829, 15
      %v877 = vpop.permute.xlu0 %876
      %878 = vrot.lane.b32.xlu0 %v831, 15
      %v879 = vpop.permute.xlu0 %878
      %v880 = vsel %vm481, %v873, %v877
      %v881 = vsel %vm481, %v875, %v879
      %v882 = vsel %vm481, %v877, %v873
      %v883 = vsel %vm481, %v879, %v875
      %v884 = vmul.f32 %v882, %v484
      %v885 = vmul.f32 %v880, %v485
      %v886 = vmul.f32 %v883, %v484
      %v887 = vmul.f32 %v881, %v485
      %v888 = vpack.c.bf16 %v885, %v884
      %v889 = vpack.c.bf16 %v887, %v886
      %890 = vst [vmem:[#allocation2 + $0x20] sm:$0xff] %v888
      %891 = vst [vmem:[#allocation2 + $0x28] sm:$0xff] %v889
      %892 = vrot.lane.b32.xlu0 %v828, 1
      %v893 = vpop.permute.xlu0 %892
      %894 = vrot.lane.b32.xlu0 %v830, 1
      %v895 = vpop.permute.xlu0 %894
      %896 = vrot.lane.b32.xlu0 %v829, 1
      %v897 = vpop.permute.xlu0 %896
      %898 = vrot.lane.b32.xlu0 %v831, 1
      %v899 = vpop.permute.xlu0 %898
      %v900 = vsel %vm497, %v893, %v897
      %v901 = vsel %vm497, %v895, %v899
      %v902 = vsel %vm497, %v897, %v893
      %v903 = vsel %vm497, %v899, %v895
      %v904 = vmul.f32 %v902, %v500
      %v905 = vmul.f32 %v900, %v501
      %v906 = vmul.f32 %v903, %v500
      %v907 = vmul.f32 %v901, %v501
      %v908 = vpack.c.bf16 %v905, %v904
      %v909 = vpack.c.bf16 %v907, %v906
      %910 = vst [vmem:[#allocation2 + $0x30] sm:$0xff] %v908
      %911 = vst [vmem:[#allocation2 + $0x38] sm:$0xff] %v909
      %v912 = vpack.c.bf16 %v829, %v828
      %v913 = vpack.c.bf16 %v831, %v830
      %914 = vst [vmem:[#allocation2 + $0x40] sm:$0xff] %v912
      %915 = vst [vmem:[#allocation2 + $0x48] sm:$0xff] %v913
      %916 = vrot.lane.b32.xlu0 %v828, 127
      %v917 = vpop.permute.xlu0 %916
      %918 = vrot.lane.b32.xlu0 %v830, 127
      %v919 = vpop.permute.xlu0 %918
      %920 = vrot.lane.b32.xlu0 %v829, 127
      %v921 = vpop.permute.xlu0 %920
      %922 = vrot.lane.b32.xlu0 %v831, 127
      %v923 = vpop.permute.xlu0 %922
      %v924 = vsel %vm515, %v917, %v921
      %v925 = vsel %vm515, %v919, %v923
      %v926 = vsel %vm515, %v921, %v917
      %v927 = vsel %vm515, %v923, %v919
      %v928 = vmul.f32 %v924, %v518
      %v929 = vmul.f32 %v926, %v519
      %v930 = vmul.f32 %v925, %v518
      %v931 = vmul.f32 %v927, %v519
      %v932 = vpack.c.bf16 %v929, %v928
      %v933 = vpack.c.bf16 %v931, %v930
      %934 = vst [vmem:[#allocation2 + $0x50] sm:$0xff] %v932
      %935 = vst [vmem:[#allocation2 + $0x58] sm:$0xff] %v933
      %936 = vrot.lane.b32.xlu0 %v828, 113
      %v937 = vpop.permute.xlu0 %936
      %938 = vrot.lane.b32.xlu0 %v830, 113
      %v939 = vpop.permute.xlu0 %938
      %940 = vrot.lane.b32.xlu0 %v829, 113
      %v941 = vpop.permute.xlu0 %940
      %942 = vrot.lane.b32.xlu0 %v831, 113
      %v943 = vpop.permute.xlu0 %942
      %v944 = vsel %vm531, %v937, %v941
      %v945 = vsel %vm531, %v939, %v943
      %v946 = vsel %vm531, %v941, %v937
      %v947 = vsel %vm531, %v943, %v939
      %v948 = vmul.f32 %v944, %v534
      %v949 = vmul.f32 %v946, %v535
      %v950 = vmul.f32 %v945, %v534
      %v951 = vmul.f32 %v947, %v535
      %v952 = vpack.c.bf16 %v949, %v948
      %v953 = vpack.c.bf16 %v951, %v950
      %954 = vst [vmem:[#allocation2 + $0x60] sm:$0xff] %v952
      %955 = vst [vmem:[#allocation2 + $0x68] sm:$0xff] %v953
      %956 = vrot.lane.b32.xlu0 %v828, 112
      %v957 = vpop.permute.xlu0 %956
      %958 = vrot.lane.b32.xlu0 %v830, 112
      %v959 = vpop.permute.xlu0 %958
      %960 = vrot.lane.b32.xlu0 %v829, 112
      %v961 = vpop.permute.xlu0 %960
      %962 = vrot.lane.b32.xlu0 %v831, 112
      %v963 = vpop.permute.xlu0 %962
      %v964 = vsel %vm547, %v957, %v961
      %v965 = vsel %vm547, %v959, %v963
      %v966 = vsel %vm547, %v961, %v957
      %v967 = vsel %vm547, %v963, %v959
      %v968 = vmul.f32 %v964, %v550
      %v969 = vmul.f32 %v966, %v551
      %v970 = vmul.f32 %v965, %v550
      %v971 = vmul.f32 %v967, %v551
      %v972 = vpack.c.bf16 %v969, %v968
      %v973 = vpack.c.bf16 %v971, %v970
      %974 = vst [vmem:[#allocation2 + $0x70] sm:$0xff] %v972
      %975 = vst [vmem:[#allocation2 + $0x78] sm:$0xff] %v973
      %976 = vrot.lane.b32.xlu0 %v828, 111
      %v977 = vpop.permute.xlu0 %976
      %978 = vrot.lane.b32.xlu0 %v830, 111
      %v979 = vpop.permute.xlu0 %978
      %980 = vrot.lane.b32.xlu0 %v829, 111
      %v981 = vpop.permute.xlu0 %980
      %982 = vrot.lane.b32.xlu0 %v831, 111
      %v983 = vpop.permute.xlu0 %982
      %v984 = vsel %vm563, %v977, %v981
      %v985 = vsel %vm563, %v979, %v983
      %v986 = vsel %vm563, %v981, %v977
      %v987 = vsel %vm563, %v983, %v979
      %v988 = vmul.f32 %v984, %v566
      %v989 = vmul.f32 %v986, %v567
      %v990 = vmul.f32 %v985, %v566
      %v991 = vmul.f32 %v987, %v567
      %v992 = vpack.c.bf16 %v989, %v988
      %v993 = vpack.c.bf16 %v991, %v990
      %994 = vst [vmem:[#allocation2 + $0x80] sm:$0xff] %v992
      %995 = vst [vmem:[#allocation2 + $0x88] sm:$0xff] %v993
      %v996 = vld [vmem:[#allocation2] sm:$0xff]
      %v997 = vld [vmem:[#allocation2 + $0x8] sm:$0xff]
      %v998 = vld [vmem:[#allocation2 + $0x10] sm:$0xff]
      %v999 = vld [vmem:[#allocation2 + $0x18] sm:$0xff]
      %v1000 = vld [vmem:[#allocation2 + $0x20] sm:$0xff]
      %v1001 = vld [vmem:[#allocation2 + $0x28] sm:$0xff]
      %v1002 = vld [vmem:[#allocation2 + $0x30] sm:$0xff]
      %v1003 = vld [vmem:[#allocation2 + $0x38] sm:$0xff]
      %v1004 = vld [vmem:[#allocation2 + $0x40] sm:$0xff]
      %v1005 = vld [vmem:[#allocation2 + $0x48] sm:$0xff]
      %v1006 = vld [vmem:[#allocation2 + $0x50] sm:$0xff]
      %v1007 = vld [vmem:[#allocation2 + $0x58] sm:$0xff]
      %v1008 = vld [vmem:[#allocation2 + $0x60] sm:$0xff]
      %v1009 = vld [vmem:[#allocation2 + $0x68] sm:$0xff]
      %v1010 = vld [vmem:[#allocation2 + $0x70] sm:$0xff]
      %v1011 = vld [vmem:[#allocation2 + $0x78] sm:$0xff]
      %v1012 = vld [vmem:[#allocation2 + $0x80] sm:$0xff]
      %v1013 = vld [vmem:[#allocation2 + $0x88] sm:$0xff]
      %v1014 = vld [vmem:[%s6] sm:$0xff]
      %v1015 = vld [vmem:[%s6 + $0x8] sm:$0xff]
      %v1016 = vld [vmem:[%s7] sm:$0xff]
      %v1017 = vld [vmem:[%s7 + $0x8] sm:$0xff]
      %1019 = vset.pattern.permute.xlu0 0
      %1020 = vperm.xlu0 %1019, %v1016
      %v1021 = vpop.permute.xlu0 %1020
      %1024 = vset.pattern.permute.xlu0 0
      %1025 = vperm.xlu0 %1024, %v1017
      %v1026 = vpop.permute.xlu0 %1025
      %v1030 = vunpack.c.l.b16 %v1014
      %v1031 = vunpack.c.h.b16 %v1014
      %v1032 = vunpack.c.l.b16 %v1015
      %v1033 = vunpack.c.h.b16 %v1015
      %v1034 = vpack.c.b16 %v1032, %v1030
      %v1035 = vpack.c.b16 %v1033, %v1031
      %v1055 = vunpack.c.l.b16 %v996
      %v1056 = vunpack.c.h.b16 %v996
      %v1057 = vunpack.c.l.b16 %v997
      %v1058 = vunpack.c.h.b16 %v997
      %v1059 = vunpack.c.l.b16 %v998
      %v1060 = vunpack.c.h.b16 %v998
      %v1061 = vunpack.c.l.b16 %v999
      %v1062 = vunpack.c.h.b16 %v999
      %v1063 = vunpack.c.l.b16 %v1000
      %v1064 = vunpack.c.h.b16 %v1000
      %v1065 = vunpack.c.l.b16 %v1001
      %v1066 = vunpack.c.h.b16 %v1001
      %v1067 = vunpack.c.l.b16 %v1002
      %v1068 = vunpack.c.h.b16 %v1002
      %v1069 = vunpack.c.l.b16 %v1003
      %v1070 = vunpack.c.h.b16 %v1003
      %v1071 = vunpack.c.l.b16 %v1004
      %v1072 = vunpack.c.h.b16 %v1004
      %v1073 = vunpack.c.l.b16 %v1005
      %v1074 = vunpack.c.h.b16 %v1005
      %v1075 = vunpack.c.l.b16 %v1006
      %v1076 = vunpack.c.h.b16 %v1006
      %v1077 = vunpack.c.l.b16 %v1007
      %v1078 = vunpack.c.h.b16 %v1007
      %v1079 = vunpack.c.l.b16 %v1008
      %v1080 = vunpack.c.h.b16 %v1008
      %v1081 = vunpack.c.l.b16 %v1009
      %v1082 = vunpack.c.h.b16 %v1009
      %v1083 = vunpack.c.l.b16 %v1010
      %v1084 = vunpack.c.h.b16 %v1010
      %v1085 = vunpack.c.l.b16 %v1011
      %v1086 = vunpack.c.h.b16 %v1011
      %v1087 = vunpack.c.l.b16 %v1012
      %v1088 = vunpack.c.h.b16 %v1012
      %v1089 = vunpack.c.l.b16 %v1013
      %v1090 = vunpack.c.h.b16 %v1013
      %v1091 = vpack.c.b16 %v1057, %v1055
      %v1092 = vpack.c.b16 %v1058, %v1056
      %v1093 = vpack.c.b16 %v1061, %v1059
      %v1094 = vpack.c.b16 %v1062, %v1060
      %v1095 = vpack.c.b16 %v1065, %v1063
      %v1096 = vpack.c.b16 %v1066, %v1064
      %v1097 = vpack.c.b16 %v1069, %v1067
      %v1098 = vpack.c.b16 %v1070, %v1068
      %v1099 = vpack.c.b16 %v1073, %v1071
      %v1100 = vpack.c.b16 %v1074, %v1072
      %v1101 = vpack.c.b16 %v1077, %v1075
      %v1102 = vpack.c.b16 %v1078, %v1076
      %v1103 = vpack.c.b16 %v1081, %v1079
      %v1104 = vpack.c.b16 %v1082, %v1080
      %v1105 = vpack.c.b16 %v1085, %v1083
      %v1106 = vpack.c.b16 %v1086, %v1084
      %v1107 = vpack.c.b16 %v1089, %v1087
      %v1108 = vpack.c.b16 %v1090, %v1088
      %vm1127 = vcmask 130048
      %v1129 = vsel %vm1127, %v1035, 0
      %1131 = vmatpush.bf16.msra.mxu0 %v1105
      %1132 = vmatpush.bf16.msra.mxu0 %v1103
      %1133 = vmatpush.bf16.msra.mxu0 %v1101
      %1134 = vmatpush.bf16.msra.mxu0 %v1099
      %1135 = vmatpush.bf16.msra.mxu0 %v1097
      %1136 = vmatpush.bf16.msra.mxu0 %v1095
      %1137 = vmatpush.bf16.msra.mxu0 %v1093
      %1138 = vmatpush.bf16.msra.mxu0 %v1091
      %1139 = vmatmul.bf16.gmra.mxu0 %v1034
      %v1140 = vpop.f32.mrf.mxu0
      %v1141 = vadd.f32 %v1021, %v1140
      %v1142 = vpop.f32.mrf.mxu0
      %v1143 = vadd.f32 %v1026, %v1142
      %1144 = vdwg.mxu0
      %1145 = vmatpush.bf16.msra.mxu0 0
      %1146 = vmatpush.bf16.msra.mxu0 0
      %1147 = vmatpush.bf16.msra.mxu0 0
      %1148 = vmatpush.bf16.msra.mxu0 0
      %1149 = vmatpush.bf16.msra.mxu0 0
      %1150 = vmatpush.bf16.msra.mxu0 0
      %1151 = vmatpush.bf16.msra.mxu0 0
      %1152 = vmatpush.bf16.msra.mxu0 %v1107
      %1153 = vmatmul.bf16.gmra.mxu0 %v1129
      %v1154 = vpop.f32.mrf.mxu0
      %v1155 = vadd.f32 %v1141, %v1154
      %v1156 = vpop.f32.mrf.mxu0
      %v1157 = vadd.f32 %v1143, %v1156
      %1158 = vdwg.mxu0
      %1159 = vmatpush.bf16.msra.mxu0 %v1106
      %1160 = vmatpush.bf16.msra.mxu0 %v1104
      %1161 = vmatpush.bf16.msra.mxu0 %v1102
      %1162 = vmatpush.bf16.msra.mxu0 %v1100
      %1163 = vmatpush.bf16.msra.mxu0 %v1098
      %1164 = vmatpush.bf16.msra.mxu0 %v1096
      %1165 = vmatpush.bf16.msra.mxu0 %v1094
      %1166 = vmatpush.bf16.msra.mxu0 %v1092
      %1167 = vmatmul.bf16.gmra.mxu0 %v1034
      %v1168 = vpop.f32.mrf.mxu0
      %v1169 = vadd.f32 %v1021, %v1168
      %v1170 = vpop.f32.mrf.mxu0
      %v1171 = vadd.f32 %v1026, %v1170
      %1172 = vdwg.mxu0
      %1173 = vmatpush.bf16.msra.mxu0 0
      %1174 = vmatpush.bf16.msra.mxu0 0
      %1175 = vmatpush.bf16.msra.mxu0 0
      %1176 = vmatpush.bf16.msra.mxu0 0
      %1177 = vmatpush.bf16.msra.mxu0 0
      %1178 = vmatpush.bf16.msra.mxu0 0
      %1179 = vmatpush.bf16.msra.mxu0 0
      %1180 = vmatpush.bf16.msra.mxu0 %v1108
      %1181 = vmatmul.bf16.gmra.mxu0 %v1129
      %v1182 = vpop.f32.mrf.mxu0
      %v1183 = vadd.f32 %v1169, %v1182
      %v1184 = vpop.f32.mrf.mxu0
      %v1185 = vadd.f32 %v1171, %v1184
      %1186 = vdwg.mxu0
      %v1187 = vmax.f32 %v1155, 0.0
      %v1188 = vmax.f32 %v1183, 0.0
      %v1189 = vmax.f32 %v1157, 0.0
      %v1190 = vmax.f32 %v1185, 0.0
      %1191 = vrot.lane.b32.xlu0 %v1187, 17
      %v1192 = vpop.permute.xlu0 %1191
      %1193 = vrot.lane.b32.xlu0 %v1189, 17
      %v1194 = vpop.permute.xlu0 %1193
      %1195 = vrot.lane.b32.xlu0 %v1188, 17
      %v1196 = vpop.permute.xlu0 %1195
      %1197 = vrot.lane.b32.xlu0 %v1190, 17
      %v1198 = vpop.permute.xlu0 %1197
      %v1199 = vsel %vm452, %v1192, %v1196
      %v1200 = vsel %vm452, %v1194, %v1198
      %v1201 = vsel %vm452, %v1196, %v1192
      %v1202 = vsel %vm452, %v1198, %v1194
      %v1203 = vmul.f32 %v1201, %v455
      %v1204 = vmul.f32 %v1199, %v456
      %v1205 = vmul.f32 %v1202, %v455
      %v1206 = vmul.f32 %v1200, %v456
      %v1207 = vpack.c.bf16 %v1204, %v1203
      %v1208 = vpack.c.bf16 %v1206, %v1205
      %1209 = vst [vmem:[#allocation2] sm:$0xff] %v1207
      %1210 = vst [vmem:[#allocation2 + $0x8] sm:$0xff] %v1208
      %1211 = vrot.lane.b32.xlu0 %v1187, 16
      %v1212 = vpop.permute.xlu0 %1211
      %1213 = vrot.lane.b32.xlu0 %v1189, 16
      %v1214 = vpop.permute.xlu0 %1213
      %1215 = vrot.lane.b32.xlu0 %v1188, 16
      %v1216 = vpop.permute.xlu0 %1215
      %1217 = vrot.lane.b32.xlu0 %v1190, 16
      %v1218 = vpop.permute.xlu0 %1217
      %v1219 = vsel %vm465, %v1212, %v1216
      %v1220 = vsel %vm465, %v1214, %v1218
      %v1221 = vsel %vm465, %v1216, %v1212
      %v1222 = vsel %vm465, %v1218, %v1214
      %v1223 = vmul.f32 %v1221, %v468
      %v1224 = vmul.f32 %v1219, %v469
      %v1225 = vmul.f32 %v1222, %v468
      %v1226 = vmul.f32 %v1220, %v469
      %v1227 = vpack.c.bf16 %v1224, %v1223
      %v1228 = vpack.c.bf16 %v1226, %v1225
      %1229 = vst [vmem:[#allocation2 + $0x10] sm:$0xff] %v1227
      %1230 = vst [vmem:[#allocation2 + $0x18] sm:$0xff] %v1228
      %1231 = vrot.lane.b32.xlu0 %v1187, 15
      %v1232 = vpop.permute.xlu0 %1231
      %1233 = vrot.lane.b32.xlu0 %v1189, 15
      %v1234 = vpop.permute.xlu0 %1233
      %1235 = vrot.lane.b32.xlu0 %v1188, 15
      %v1236 = vpop.permute.xlu0 %1235
      %1237 = vrot.lane.b32.xlu0 %v1190, 15
      %v1238 = vpop.permute.xlu0 %1237
      %v1239 = vsel %vm481, %v1232, %v1236
      %v1240 = vsel %vm481, %v1234, %v1238
      %v1241 = vsel %vm481, %v1236, %v1232
      %v1242 = vsel %vm481, %v1238, %v1234
      %v1243 = vmul.f32 %v1241, %v484
      %v1244 = vmul.f32 %v1239, %v485
      %v1245 = vmul.f32 %v1242, %v484
      %v1246 = vmul.f32 %v1240, %v485
      %v1247 = vpack.c.bf16 %v1244, %v1243
      %v1248 = vpack.c.bf16 %v1246, %v1245
      %1249 = vst [vmem:[#allocation2 + $0x20] sm:$0xff] %v1247
      %1250 = vst [vmem:[#allocation2 + $0x28] sm:$0xff] %v1248
      %1251 = vrot.lane.b32.xlu0 %v1187, 1
      %v1252 = vpop.permute.xlu0 %1251
      %1253 = vrot.lane.b32.xlu0 %v1189, 1
      %v1254 = vpop.permute.xlu0 %1253
      %1255 = vrot.lane.b32.xlu0 %v1188, 1
      %v1256 = vpop.permute.xlu0 %1255
      %1257 = vrot.lane.b32.xlu0 %v1190, 1
      %v1258 = vpop.permute.xlu0 %1257
      %v1259 = vsel %vm497, %v1252, %v1256
      %v1260 = vsel %vm497, %v1254, %v1258
      %v1261 = vsel %vm497, %v1256, %v1252
      %v1262 = vsel %vm497, %v1258, %v1254
      %v1263 = vmul.f32 %v1261, %v500
      %v1264 = vmul.f32 %v1259, %v501
      %v1265 = vmul.f32 %v1262, %v500
      %v1266 = vmul.f32 %v1260, %v501
      %v1267 = vpack.c.bf16 %v1264, %v1263
      %v1268 = vpack.c.bf16 %v1266, %v1265
      %1269 = vst [vmem:[#allocation2 + $0x30] sm:$0xff] %v1267
      %1270 = vst [vmem:[#allocation2 + $0x38] sm:$0xff] %v1268
      %v1271 = vpack.c.bf16 %v1188, %v1187
      %v1272 = vpack.c.bf16 %v1190, %v1189
      %1273 = vst [vmem:[#allocation2 + $0x40] sm:$0xff] %v1271
      %1274 = vst [vmem:[#allocation2 + $0x48] sm:$0xff] %v1272
      %1275 = vrot.lane.b32.xlu0 %v1187, 127
      %v1276 = vpop.permute.xlu0 %1275
      %1277 = vrot.lane.b32.xlu0 %v1189, 127
      %v1278 = vpop.permute.xlu0 %1277
      %1279 = vrot.lane.b32.xlu0 %v1188, 127
      %v1280 = vpop.permute.xlu0 %1279
      %1281 = vrot.lane.b32.xlu0 %v1190, 127
      %v1282 = vpop.permute.xlu0 %1281
      %v1283 = vsel %vm515, %v1276, %v1280
      %v1284 = vsel %vm515, %v1278, %v1282
      %v1285 = vsel %vm515, %v1280, %v1276
      %v1286 = vsel %vm515, %v1282, %v1278
      %v1287 = vmul.f32 %v1283, %v518
      %v1288 = vmul.f32 %v1285, %v519
      %v1289 = vmul.f32 %v1284, %v518
      %v1290 = vmul.f32 %v1286, %v519
      %v1291 = vpack.c.bf16 %v1288, %v1287
      %v1292 = vpack.c.bf16 %v1290, %v1289
      %1293 = vst [vmem:[#allocation2 + $0x50] sm:$0xff] %v1291
      %1294 = vst [vmem:[#allocation2 + $0x58] sm:$0xff] %v1292
      %1295 = vrot.lane.b32.xlu0 %v1187, 113
      %v1296 = vpop.permute.xlu0 %1295
      %1297 = vrot.lane.b32.xlu0 %v1189, 113
      %v1298 = vpop.permute.xlu0 %1297
      %1299 = vrot.lane.b32.xlu0 %v1188, 113
      %v1300 = vpop.permute.xlu0 %1299
      %1301 = vrot.lane.b32.xlu0 %v1190, 113
      %v1302 = vpop.permute.xlu0 %1301
      %v1303 = vsel %vm531, %v1296, %v1300
      %v1304 = vsel %vm531, %v1298, %v1302
      %v1305 = vsel %vm531, %v1300, %v1296
      %v1306 = vsel %vm531, %v1302, %v1298
      %v1307 = vmul.f32 %v1303, %v534
      %v1308 = vmul.f32 %v1305, %v535
      %v1309 = vmul.f32 %v1304, %v534
      %v1310 = vmul.f32 %v1306, %v535
      %v1311 = vpack.c.bf16 %v1308, %v1307
      %v1312 = vpack.c.bf16 %v1310, %v1309
      %1313 = vst [vmem:[#allocation2 + $0x60] sm:$0xff] %v1311
      %1314 = vst [vmem:[#allocation2 + $0x68] sm:$0xff] %v1312
      %1315 = vrot.lane.b32.xlu0 %v1187, 112
      %v1316 = vpop.permute.xlu0 %1315
      %1317 = vrot.lane.b32.xlu0 %v1189, 112
      %v1318 = vpop.permute.xlu0 %1317
      %1319 = vrot.lane.b32.xlu0 %v1188, 112
      %v1320 = vpop.permute.xlu0 %1319
      %1321 = vrot.lane.b32.xlu0 %v1190, 112
      %v1322 = vpop.permute.xlu0 %1321
      %v1323 = vsel %vm547, %v1316, %v1320
      %v1324 = vsel %vm547, %v1318, %v1322
      %v1325 = vsel %vm547, %v1320, %v1316
      %v1326 = vsel %vm547, %v1322, %v1318
      %v1327 = vmul.f32 %v1323, %v550
      %v1328 = vmul.f32 %v1325, %v551
      %v1329 = vmul.f32 %v1324, %v550
      %v1330 = vmul.f32 %v1326, %v551
      %v1331 = vpack.c.bf16 %v1328, %v1327
      %v1332 = vpack.c.bf16 %v1330, %v1329
      %1333 = vst [vmem:[#allocation2 + $0x70] sm:$0xff] %v1331
      %1334 = vst [vmem:[#allocation2 + $0x78] sm:$0xff] %v1332
      %1335 = vrot.lane.b32.xlu0 %v1187, 111
      %v1336 = vpop.permute.xlu0 %1335
      %1337 = vrot.lane.b32.xlu0 %v1189, 111
      %v1338 = vpop.permute.xlu0 %1337
      %1339 = vrot.lane.b32.xlu0 %v1188, 111
      %v1340 = vpop.permute.xlu0 %1339
      %1341 = vrot.lane.b32.xlu0 %v1190, 111
      %v1342 = vpop.permute.xlu0 %1341
      %v1343 = vsel %vm563, %v1336, %v1340
      %v1344 = vsel %vm563, %v1338, %v1342
      %v1345 = vsel %vm563, %v1340, %v1336
      %v1346 = vsel %vm563, %v1342, %v1338
      %v1347 = vmul.f32 %v1343, %v566
      %v1348 = vmul.f32 %v1345, %v567
      %v1349 = vmul.f32 %v1344, %v566
      %v1350 = vmul.f32 %v1346, %v567
      %v1351 = vpack.c.bf16 %v1348, %v1347
      %v1352 = vpack.c.bf16 %v1350, %v1349
      %1353 = vst [vmem:[#allocation2 + $0x80] sm:$0xff] %v1351
      %1354 = vst [vmem:[#allocation2 + $0x88] sm:$0xff] %v1352
      %v1355 = vld [vmem:[#allocation2] sm:$0xff]
      %v1356 = vld [vmem:[#allocation2 + $0x8] sm:$0xff]
      %v1357 = vld [vmem:[#allocation2 + $0x10] sm:$0xff]
      %v1358 = vld [vmem:[#allocation2 + $0x18] sm:$0xff]
      %v1359 = vld [vmem:[#allocation2 + $0x20] sm:$0xff]
      %v1360 = vld [vmem:[#allocation2 + $0x28] sm:$0xff]
      %v1361 = vld [vmem:[#allocation2 + $0x30] sm:$0xff]
      %v1362 = vld [vmem:[#allocation2 + $0x38] sm:$0xff]
      %v1363 = vld [vmem:[#allocation2 + $0x40] sm:$0xff]
      %v1364 = vld [vmem:[#allocation2 + $0x48] sm:$0xff]
      %v1365 = vld [vmem:[#allocation2 + $0x50] sm:$0xff]
      %v1366 = vld [vmem:[#allocation2 + $0x58] sm:$0xff]
      %v1367 = vld [vmem:[#allocation2 + $0x60] sm:$0xff]
      %v1368 = vld [vmem:[#allocation2 + $0x68] sm:$0xff]
      %v1369 = vld [vmem:[#allocation2 + $0x70] sm:$0xff]
      %v1370 = vld [vmem:[#allocation2 + $0x78] sm:$0xff]
      %v1371 = vld [vmem:[#allocation2 + $0x80] sm:$0xff]
      %v1372 = vld [vmem:[#allocation2 + $0x88] sm:$0xff]
      %v1373 = vld [vmem:[%s8] sm:$0xff]
      %v1374 = vld [vmem:[%s9] sm:$0xff]
      %1376 = vset.pattern.permute.xlu0 0
      %1377 = vperm.xlu0 %1376, %v1374
      %v1378 = vpop.permute.xlu0 %1377
      %v1381 = vunpack.c.l.b16 %v1373
      %v1382 = vunpack.c.h.b16 %v1373
      %v1383 = vpack.c.b16 %v1381, %v1381
      %v1384 = vpack.c.b16 %v1382, %v1382
      %v1404 = vunpack.c.l.b16 %v1355
      %v1405 = vunpack.c.h.b16 %v1355
      %v1406 = vunpack.c.l.b16 %v1356
      %v1407 = vunpack.c.h.b16 %v1356
      %v1408 = vunpack.c.l.b16 %v1357
      %v1409 = vunpack.c.h.b16 %v1357
      %v1410 = vunpack.c.l.b16 %v1358
      %v1411 = vunpack.c.h.b16 %v1358
      %v1412 = vunpack.c.l.b16 %v1359
      %v1413 = vunpack.c.h.b16 %v1359
      %v1414 = vunpack.c.l.b16 %v1360
      %v1415 = vunpack.c.h.b16 %v1360
      %v1416 = vunpack.c.l.b16 %v1361
      %v1417 = vunpack.c.h.b16 %v1361
      %v1418 = vunpack.c.l.b16 %v1362
      %v1419 = vunpack.c.h.b16 %v1362
      %v1420 = vunpack.c.l.b16 %v1363
      %v1421 = vunpack.c.h.b16 %v1363
      %v1422 = vunpack.c.l.b16 %v1364
      %v1423 = vunpack.c.h.b16 %v1364
      %v1424 = vunpack.c.l.b16 %v1365
      %v1425 = vunpack.c.h.b16 %v1365
      %v1426 = vunpack.c.l.b16 %v1366
      %v1427 = vunpack.c.h.b16 %v1366
      %v1428 = vunpack.c.l.b16 %v1367
      %v1429 = vunpack.c.h.b16 %v1367
      %v1430 = vunpack.c.l.b16 %v1368
      %v1431 = vunpack.c.h.b16 %v1368
      %v1432 = vunpack.c.l.b16 %v1369
      %v1433 = vunpack.c.h.b16 %v1369
      %v1434 = vunpack.c.l.b16 %v1370
      %v1435 = vunpack.c.h.b16 %v1370
      %v1436 = vunpack.c.l.b16 %v1371
      %v1437 = vunpack.c.h.b16 %v1371
      %v1438 = vunpack.c.l.b16 %v1372
      %v1439 = vunpack.c.h.b16 %v1372
      %v1440 = vpack.c.b16 %v1406, %v1404
      %v1441 = vpack.c.b16 %v1407, %v1405
      %v1442 = vpack.c.b16 %v1410, %v1408
      %v1443 = vpack.c.b16 %v1411, %v1409
      %v1444 = vpack.c.b16 %v1414, %v1412
      %v1445 = vpack.c.b16 %v1415, %v1413
      %v1446 = vpack.c.b16 %v1418, %v1416
      %v1447 = vpack.c.b16 %v1419, %v1417
      %v1448 = vpack.c.b16 %v1422, %v1420
      %v1449 = vpack.c.b16 %v1423, %v1421
      %v1450 = vpack.c.b16 %v1426, %v1424
      %v1451 = vpack.c.b16 %v1427, %v1425
      %v1452 = vpack.c.b16 %v1430, %v1428
      %v1453 = vpack.c.b16 %v1431, %v1429
      %v1454 = vpack.c.b16 %v1434, %v1432
      %v1455 = vpack.c.b16 %v1435, %v1433
      %v1456 = vpack.c.b16 %v1438, %v1436
      %v1457 = vpack.c.b16 %v1439, %v1437
      %v1477 = vsel %vm1127, %v1384, 0
      %1479 = vmatpush.bf16.msra.mxu0 %v1454
      %1480 = vmatpush.bf16.msra.mxu0 %v1452
      %1481 = vmatpush.bf16.msra.mxu0 %v1450
      %1482 = vmatpush.bf16.msra.mxu0 %v1448
      %1483 = vmatpush.bf16.msra.mxu0 %v1446
      %1484 = vmatpush.bf16.msra.mxu0 %v1444
      %1485 = vmatpush.bf16.msra.mxu0 %v1442
      %1486 = vmatpush.bf16.msra.mxu0 %v1440
      %1487 = vmatmul.bf16.gmra.mxu0 %v1383
      %v1488 = vpop.f32.mrf.mxu0
      %v1489 = vadd.f32 %v1378, %v1488
      %v1490 = vpop.f32.mrf.mxu0
      %1491 = vdwg.mxu0
      %1492 = vmatpush.bf16.msra.mxu0 0
      %1493 = vmatpush.bf16.msra.mxu0 0
      %1494 = vmatpush.bf16.msra.mxu0 0
      %1495 = vmatpush.bf16.msra.mxu0 0
      %1496 = vmatpush.bf16.msra.mxu0 0
      %1497 = vmatpush.bf16.msra.mxu0 0
      %1498 = vmatpush.bf16.msra.mxu0 0
      %1499 = vmatpush.bf16.msra.mxu0 %v1456
      %1500 = vmatmul.bf16.gmra.mxu0 %v1477
      %v1501 = vpop.f32.mrf.mxu0
      %v1502 = vadd.f32 %v1489, %v1501
      %v1503 = vpop.f32.mrf.mxu0
      %1504 = vdwg.mxu0
      %1505 = vmatpush.bf16.msra.mxu0 %v1455
      %1506 = vmatpush.bf16.msra.mxu0 %v1453
      %1507 = vmatpush.bf16.msra.mxu0 %v1451
      %1508 = vmatpush.bf16.msra.mxu0 %v1449
      %1509 = vmatpush.bf16.msra.mxu0 %v1447
      %1510 = vmatpush.bf16.msra.mxu0 %v1445
      %1511 = vmatpush.bf16.msra.mxu0 %v1443
      %1512 = vmatpush.bf16.msra.mxu0 %v1441
      %1513 = vmatmul.bf16.gmra.mxu0 %v1383
      %v1514 = vpop.f32.mrf.mxu0
      %v1515 = vadd.f32 %v1378, %v1514
      %v1516 = vpop.f32.mrf.mxu0
      %1517 = vdwg.mxu0
      %1518 = vmatpush.bf16.msra.mxu0 0
      %1519 = vmatpush.bf16.msra.mxu0 0
      %1520 = vmatpush.bf16.msra.mxu0 0
      %1521 = vmatpush.bf16.msra.mxu0 0
      %1522 = vmatpush.bf16.msra.mxu0 0
      %1523 = vmatpush.bf16.msra.mxu0 0
      %1524 = vmatpush.bf16.msra.mxu0 0
      %1525 = vmatpush.bf16.msra.mxu0 %v1457
      %1526 = vmatmul.bf16.gmra.mxu0 %v1477
      %v1527 = vpop.f32.mrf.mxu0
      %v1528 = vadd.f32 %v1515, %v1527
      %v1529 = vpop.f32.mrf.mxu0
      %1530 = vdwg.mxu0
      %v1531 = vmax.f32 %v1502, 0.0
      %v1532 = vmax.f32 %v1528, 0.0
      %1533 = vrot.lane.b32.xlu0 %v1531, 17
      %v1534 = vpop.permute.xlu0 %1533
      %1535 = vrot.lane.b32.xlu0 %v1532, 17
      %v1536 = vpop.permute.xlu0 %1535
      %v1537 = vsel %vm452, %v1534, %v1536
      %v1538 = vsel %vm452, %v1536, %v1534
      %v1539 = vmul.f32 %v1538, %v455
      %v1540 = vmul.f32 %v1537, %v456
      %v1541 = vpack.c.bf16 %v1540, %v1539
      %1542 = vst [vmem:[#allocation2] sm:$0xff] %v1541
      %1543 = vrot.lane.b32.xlu0 %v1531, 16
      %v1544 = vpop.permute.xlu0 %1543
      %1545 = vrot.lane.b32.xlu0 %v1532, 16
      %v1546 = vpop.permute.xlu0 %1545
      %v1547 = vsel %vm465, %v1544, %v1546
      %v1548 = vsel %vm465, %v1546, %v1544
      %v1549 = vmul.f32 %v1548, %v468
      %v1550 = vmul.f32 %v1547, %v469
      %v1551 = vpack.c.bf16 %v1550, %v1549
      %1552 = vst [vmem:[#allocation2 + $0x8] sm:$0xff] %v1551
      %1553 = vrot.lane.b32.xlu0 %v1531, 15
      %v1554 = vpop.permute.xlu0 %1553
      %1555 = vrot.lane.b32.xlu0 %v1532, 15
      %v1556 = vpop.permute.xlu0 %1555
      %v1557 = vsel %vm481, %v1554, %v1556
      %v1558 = vsel %vm481, %v1556, %v1554
      %v1559 = vmul.f32 %v1558, %v484
      %v1560 = vmul.f32 %v1557, %v485
      %v1561 = vpack.c.bf16 %v1560, %v1559
      %1562 = vst [vmem:[#allocation2 + $0x10] sm:$0xff] %v1561
      %1563 = vrot.lane.b32.xlu0 %v1531, 1
      %v1564 = vpop.permute.xlu0 %1563
      %1565 = vrot.lane.b32.xlu0 %v1532, 1
      %v1566 = vpop.permute.xlu0 %1565
      %v1567 = vsel %vm497, %v1564, %v1566
      %v1568 = vsel %vm497, %v1566, %v1564
      %v1569 = vmul.f32 %v1568, %v500
      %v1570 = vmul.f32 %v1567, %v501
      %v1571 = vpack.c.bf16 %v1570, %v1569
      %1572 = vst [vmem:[#allocation2 + $0x18] sm:$0xff] %v1571
      %v1573 = vpack.c.bf16 %v1532, %v1531
      %1574 = vst [vmem:[#allocation2 + $0x20] sm:$0xff] %v1573
      %1575 = vrot.lane.b32.xlu0 %v1531, 127
      %v1576 = vpop.permute.xlu0 %1575
      %1577 = vrot.lane.b32.xlu0 %v1532, 127
      %v1578 = vpop.permute.xlu0 %1577
      %v1579 = vsel %vm515, %v1576, %v1578
      %v1580 = vsel %vm515, %v1578, %v1576
      %v1581 = vmul.f32 %v1579, %v518
      %v1582 = vmul.f32 %v1580, %v519
      %v1583 = vpack.c.bf16 %v1582, %v1581
      %1584 = vst [vmem:[#allocation2 + $0x28] sm:$0xff] %v1583
      %1585 = vrot.lane.b32.xlu0 %v1531, 113
      %v1586 = vpop.permute.xlu0 %1585
      %1587 = vrot.lane.b32.xlu0 %v1532, 113
      %v1588 = vpop.permute.xlu0 %1587
      %v1589 = vsel %vm531, %v1586, %v1588
      %v1590 = vsel %vm531, %v1588, %v1586
      %v1591 = vmul.f32 %v1589, %v534
      %v1592 = vmul.f32 %v1590, %v535
      %v1593 = vpack.c.bf16 %v1592, %v1591
      %1594 = vst [vmem:[#allocation2 + $0x30] sm:$0xff] %v1593
      %1595 = vrot.lane.b32.xlu0 %v1531, 112
      %v1596 = vpop.permute.xlu0 %1595
      %1597 = vrot.lane.b32.xlu0 %v1532, 112
      %v1598 = vpop.permute.xlu0 %1597
      %v1599 = vsel %vm547, %v1596, %v1598
      %v1600 = vsel %vm547, %v1598, %v1596
      %v1601 = vmul.f32 %v1599, %v550
      %v1602 = vmul.f32 %v1600, %v551
      %v1603 = vpack.c.bf16 %v1602, %v1601
      %1604 = vst [vmem:[#allocation2 + $0x38] sm:$0xff] %v1603
      %1605 = vrot.lane.b32.xlu0 %v1531, 111
      %v1606 = vpop.permute.xlu0 %1605
      %1607 = vrot.lane.b32.xlu0 %v1532, 111
      %v1608 = vpop.permute.xlu0 %1607
      %v1609 = vsel %vm563, %v1606, %v1608
      %v1610 = vsel %vm563, %v1608, %v1606
      %v1611 = vmul.f32 %v1609, %v566
      %v1612 = vmul.f32 %v1610, %v567
      %v1613 = vpack.c.bf16 %v1612, %v1611
      %1614 = vst [vmem:[#allocation2 + $0x40] sm:$0xff] %v1613
      %v1615 = vld [vmem:[#allocation2] sm:$0xff]
      %v1616 = vld [vmem:[#allocation2 + $0x8] sm:$0xff]
      %v1617 = vld [vmem:[#allocation2 + $0x10] sm:$0xff]
      %v1618 = vld [vmem:[#allocation2 + $0x18] sm:$0xff]
      %v1619 = vld [vmem:[#allocation2 + $0x20] sm:$0xff]
      %v1620 = vld [vmem:[#allocation2 + $0x28] sm:$0xff]
      %v1621 = vld [vmem:[#allocation2 + $0x30] sm:$0xff]
      %v1622 = vld [vmem:[#allocation2 + $0x38] sm:$0xff]
      %v1623 = vld [vmem:[#allocation2 + $0x40] sm:$0xff]
      %v1624 = vld [vmem:[%s10] sm:$0x3]
      %v1634 = vunpack.c.l.b16 %v1615
      %v1635 = vunpack.c.h.b16 %v1615
      %v1636 = vunpack.c.l.b16 %v1616
      %v1637 = vunpack.c.h.b16 %v1616
      %v1638 = vunpack.c.l.b16 %v1617
      %v1639 = vunpack.c.h.b16 %v1617
      %v1640 = vunpack.c.l.b16 %v1618
      %v1641 = vunpack.c.h.b16 %v1618
      %v1642 = vunpack.c.l.b16 %v1619
      %v1643 = vunpack.c.h.b16 %v1619
      %v1644 = vunpack.c.l.b16 %v1620
      %v1645 = vunpack.c.h.b16 %v1620
      %v1646 = vunpack.c.l.b16 %v1621
      %v1647 = vunpack.c.h.b16 %v1621
      %v1648 = vunpack.c.l.b16 %v1622
      %v1649 = vunpack.c.h.b16 %v1622
      %v1650 = vunpack.c.l.b16 %v1623
      %v1651 = vunpack.c.h.b16 %v1623
      %v1652 = vpack.c.b16 %v1636, %v1634
      %v1653 = vpack.c.b16 %v1637, %v1635
      %v1654 = vpack.c.b16 %v1640, %v1638
      %v1655 = vpack.c.b16 %v1641, %v1639
      %v1656 = vpack.c.b16 %v1644, %v1642
      %v1657 = vpack.c.b16 %v1645, %v1643
      %v1658 = vpack.c.b16 %v1648, %v1646
      %v1659 = vpack.c.b16 %v1649, %v1647
      %v1660 = vpack.c.b16 %v1650, %v1650
      %v1661 = vpack.c.b16 %v1651, %v1651
      %v1671 = vsel %vm790, %v1624, 0
      %v1674 = vsel %vm400, %v1660, 0
      %v1677 = vsel %vm400, %v1661, 0
      %1679 = vmatpush.bf16.msra.mxu0 0
      %1680 = vmatpush.bf16.msra.mxu0 0
      %1681 = vmatpush.bf16.msra.mxu0 0
      %1682 = vmatpush.bf16.msra.mxu0 %v1674
      %1683 = vmatpush.bf16.msra.mxu0 %v1658
      %1684 = vmatpush.bf16.msra.mxu0 %v1656
      %1685 = vmatpush.bf16.msra.mxu0 %v1654
      %1686 = vmatpush.bf16.msra.mxu0 %v1652
      %1687 = vmatmul.bf16.gmra.mxu0 %v1671
      %v1688 = vpop.f32.mrf.mxu0
      %v1689 = vadd.f32 0.0, %v1688
      %v1690 = vpop.f32.mrf.mxu0
      %1691 = vdwg.mxu0
      %1692 = vmatpush.bf16.msra.mxu0 0
      %1693 = vmatpush.bf16.msra.mxu0 0
      %1694 = vmatpush.bf16.msra.mxu0 0
      %1695 = vmatpush.bf16.msra.mxu0 %v1677
      %1696 = vmatpush.bf16.msra.mxu0 %v1659
      %1697 = vmatpush.bf16.msra.mxu0 %v1657
      %1698 = vmatpush.bf16.msra.mxu0 %v1655
      %1699 = vmatpush.bf16.msra.mxu0 %v1653
      %1700 = vmatmul.bf16.gmra.mxu0 %v1671
      %v1701 = vpop.f32.mrf.mxu0
      %v1702 = vadd.f32 0.0, %v1701
      %v1703 = vpop.f32.mrf.mxu0
      %1704 = vdwg.mxu0
      %v1705 = vsel %vm400, %v1689, -inf
      %v1706 = vrot.slane %v1705, 4
      %v1707 = vmax.f32 %v1705, %v1706
      %v1708 = vrot.slane %v1707, 2
      %v1709 = vmax.f32 %v1707, %v1708
      %v1710 = vrot.slane %v1709, 1
      %v1711 = vmax.f32 %v1709, %v1710
      %v1712 = vsel %vm400, %v1702, -inf
      %v1713 = vrot.slane %v1712, 4
      %v1714 = vmax.f32 %v1712, %v1713
      %v1715 = vrot.slane %v1714, 2
      %v1716 = vmax.f32 %v1714, %v1715
      %v1717 = vrot.slane %v1716, 1
      %v1718 = vmax.f32 %v1716, %v1717
      %v1719 = vsub.f32 %v1689, %v1711
      %v1720 = vsub.f32 %v1702, %v1718
      %v1721 = vmul.f32 %v1719, 1.442695
      %v1722 = vpow.pop %v1721
      %v1723 = vmul.f32 %v1720, 1.442695
      %v1724 = vpow.pop %v1723
      %v1725 = vsel %vm400, %v1722, 0.0
      %v1726 = vrot.slane %v1725, 4
      %v1727 = vadd.f32 %v1725, %v1726
      %v1728 = vrot.slane %v1727, 2
      %v1729 = vadd.f32 %v1727, %v1728
      %v1730 = vrot.slane %v1729, 1
      %v1731 = vadd.f32 %v1729, %v1730
      %v1732 = vsel %vm400, %v1724, 0.0
      %v1733 = vrot.slane %v1732, 4
      %v1734 = vadd.f32 %v1732, %v1733
      %v1735 = vrot.slane %v1734, 2
      %v1736 = vadd.f32 %v1734, %v1735
      %v1737 = vrot.slane %v1736, 1
      %v1738 = vadd.f32 %v1736, %v1737
      %v1739 = vrcp.pop %v1731
      %v1740 = vrcp.pop %v1738
      %v1741 = vmul.f32 %v1722, %v1739
      %v1742 = vmul.f32 %v1724, %v1740
      %v1745 = vrot.slane %v1742, 4
      %v1746 = vsel %vm400, %v1741, %v1745
      %1748 = vst [vmem:[%s386] sm:$0xff] %v1746
      %s1749 = smul.u32 2, %s22
      %p1750 = scmp.lt.s32.totalorder %s1749, 3
      %s1751 = scalar_select %p1750, %s1749, 3
      %s1752 = smul.addr %s1751, 4
      %s1753 = scalar_lea.vmem %s11, %s1752
      // Predicated region
      $region65: #{_fsfb_sp_call.1} parent=63 // pred_check
        %p1754 = pneg %p276
      $region66: #{_fsfb_sp_call.1} parent=63 // pred_check_branch
        %1756 = sbr.rel (%p1754) target = $region68
      $region67: #{_fsfb_sp_call.1} parent=63 // pred_region
        %s1757 = smul.u32 2, %s22
      $region68: #{_fsfb_sp_call.1} parent=63 // pred_fallthru
        _
    $region64: #{_fsfb_sp_call.1} parent=5 // pred_fallthru
      _
    %p1758 = scmp.le.s32.totalorder 2, %s17
    // Predicated region
    $region69: #{_fsfb_sp_call.1} parent=5 // pred_check
      %p1759 = pneg %p1758
    $region70: #{_fsfb_sp_call.1} parent=5 // pred_check_branch
      %1761 = sbr.rel (%p1759) target = $region72
    $region71: #{_fsfb_sp_call.1} parent=5 // pred_region
      %s1762 = ssub.s32 %s17, 2
      // Predicated region
      $region73: #{_fsfb_sp_call.1} parent=71 // pred_check
        %p1763 = pneg %p282
      $region74: #{_fsfb_sp_call.1} parent=71 // pred_check_branch
        %1765 = sbr.rel (%p1763) target = $region76
      $region75: #{_fsfb_sp_call.1} parent=71 // pred_region
        %s1766 = smul.u32 2, %s23
        %p1767 = scmp.lt.s32.totalorder %s1766, 3
        %s1768 = scalar_select %p1767, %s1766, 3
        %s1769 = smul.addr %s1768, 4
        %s1770 = scalar_lea.vmem %s11, %s1769
      $region76: #{_fsfb_sp_call.1} parent=71 // pred_fallthru
        _
    $region72: #{_fsfb_sp_call.1} parent=5 // pred_fallthru
      _
  $region6: #{_fsfb_sp_call.1} parent=0 // loop_footer
    %s21 = sadd.s32 1, %s17
  $region7: #{_fsfb_sp_call.1} parent=0 // loop_footer_branch
    %16 = sbr.rel target = $region3
  $region8: #{_fsfb_sp_call.1} parent=0 // loop_exit
    _

</llo_original>
